<compile_context>
chip_gen: v6e
topology: v6e:2x2x1
jax: 0.10.0
libtpu: 0.0.40
codegen_flags: <defaults>
</compile_context>

<pallas_src>
import math
import functools

import jax
import jax.numpy as jnp
import numpy as np
from jax.experimental import pallas as pl
from jax.experimental.pallas import tpu as pltpu

LN_EPS = 1e-12  # BertConfig default layer_norm_eps


# ----------------------------- helpers --------------------------------------


def _layernorm(x, gamma, beta):
    mu = jnp.mean(x, axis=-1, keepdims=True)
    var = jnp.mean((x - mu) ** 2, axis=-1, keepdims=True)
    return (x - mu) * jax.lax.rsqrt(var + LN_EPS) * gamma + beta


def _heads_per_store(nh, hs):
    """How many heads to pack per ctx store so stores are ~128 lanes wide."""
    if hs >= 128:
        return 1
    hps = min(max(1, 128 // hs), nh)
    while nh % hps != 0:
        hps -= 1
    return hps


def _pick_seq_tile(S):
    """Largest divisor of S that is <= 256 and a multiple of 8 (else S)."""
    if S <= 256:
        return S
    for t in range(256, 0, -8):
        if S % t == 0:
            return t
    return S  # no aligned divisor; fall back to whole-sequence blocks


def _vmem_limit_bytes():
    try:
        cap = int(pltpu.get_tpu_info().vmem_capacity_bytes)
    except Exception:
        cap = 64 * 1024 * 1024     # conservative (v7x physical VMEM per core)
    return cap * 4 // 5            # leave headroom for compiler scratch


def _const_spec(shape, grid_rank, single_buffer):
    """BlockSpec for a grid-invariant (resident) operand."""
    zeros = (0,) * len(shape)
    imap = (lambda b: zeros) if grid_rank == 1 else (lambda b, s: zeros)
    if single_buffer:
        return pl.BlockSpec(shape, imap, pipeline_mode=pl.Buffered(1))
    return pl.BlockSpec(shape, imap)


# ----------------------------- kernels --------------------------------------


def _attention_kernel(x_ref, mask_ref, wqkv_ref, bqkv_ref, ctx_ref,
                      *, nh, hs, heads_per_store):
    """Per-batch-element self-attention: fused QKV + per-head softmax."""
    x = x_ref[0]              # [S, H] f32
    mask_add = mask_ref[0]    # [1, S] f32 additive mask (broadcast over queries)

    # Fused QKV projection (1/sqrt(hs) is pre-folded into the Q columns).
    qkv = (jnp.dot(x.astype(jnp.bfloat16), wqkv_ref[...],
                   preferred_element_type=jnp.float32) + bqkv_ref[...])
    qkv = qkv.astype(jnp.bfloat16)        # single cast; head slices stay bf16

    H = nh * hs
    for c in range(nh // heads_per_store):          # static unroll over heads
        parts = []
        for j in range(heads_per_store):
            h = c * heads_per_store + j
            qh = qkv[:, h * hs:(h + 1) * hs]
            kh = qkv[:, H + h * hs:H + (h + 1) * hs]
            vh = qkv[:, 2 * H + h * hs:2 * H + (h + 1) * hs]

            s = jax.lax.dot_general(
                qh, kh, (((1,), (1,)), ((), ())),
                preferred_element_type=jnp.float32)          # [S, S] f32
            s = s + mask_add
            s = s - jnp.max(s, axis=-1, keepdims=True)
            p = jnp.exp(s.astype(jnp.bfloat16))              # bf16 EUP exp
            denom = jnp.sum(p, axis=-1, keepdims=True, dtype=jnp.float32)
            pv = jnp.dot(p, vh, preferred_element_type=jnp.float32)
            # Normalize after the PV matmul ([S, hs] muls instead of [S, S]).
            parts.append(pv * pl.reciprocal(denom, approx=True))
        blk = parts[0] if len(parts) == 1 else jnp.concatenate(parts, axis=-1)
        lo = c * heads_per_store * hs
        ctx_ref[0, :, lo:lo + heads_per_store * hs] = blk.astype(ctx_ref.dtype)


def _output_ffn_kernel(x_ref, ctx_ref, wo_ref, bo_ref, g1_ref, b1_ref,
                       wi_ref, bi_ref, wo2_ref, bo2_ref, g2_ref, b2_ref,
                       out_ref):
    """Attention-output dense + LN, intermediate GELU, output dense + LN."""
    x = x_ref[0]        # [tS, H] residual (layer input), f32
    ctx = ctx_ref[0]    # [tS, H] attention context, bf16 (MXU operand only)

    # BertSelfOutput: dense + residual + LayerNorm
    a = (jnp.dot(ctx, wo_ref[...], preferred_element_type=jnp.float32)
         + bo_ref[...])
    h = _layernorm(a + x, g1_ref[...], b1_ref[...])

    # BertIntermediate: dense + exact (erf) GELU
    inter = jnp.dot(h.astype(jnp.bfloat16), wi_ref[...],
                    preferred_element_type=jnp.float32) + bi_ref[...]
    inter = jax.nn.gelu(inter, approximate=False)

    # BertOutput: dense + residual + LayerNorm
    o = jnp.dot(inter.astype(jnp.bfloat16), wo2_ref[...],
                preferred_element_type=jnp.float32) + bo2_ref[...]
    out_ref[0] = _layernorm(o + h, g2_ref[...], b2_ref[...])


# ----------------------------- wrappers --------------------------------------


def _bert_layer(hidden, mask_add, lp, head_num, head_size, seq_tile,
                vmem_limit, single_buffer_weights):
    B, S, H = hidden.shape
    nh, hs = head_num, head_size
    I = 4 * H
    hps = _heads_per_store(nh, hs)

    cost_attn = pl.CostEstimate(
        flops=int(2 * B * S * H * 3 * H + 4 * B * nh * S * S * hs),
        transcendentals=int(B * nh * S * S),
        bytes_accessed=int(B * S * H * 4 + B * S * H * 2 + B * S * 4
                           + H * 3 * H * 2 + 3 * H * 4),
    )

    # NOTE(v7x): with grid=(B,) small / odd B can leave a TensorCore idle; a
    # query-tile or head-pair grid axis would improve 2-TC load balance there.
    ctx = pl.pallas_call(
        functools.partial(_attention_kernel, nh=nh, hs=hs,
                          heads_per_store=hps),
        grid=(B,),
        in_specs=[
            pl.BlockSpec((1, S, H), lambda b: (b, 0, 0)),        # hidden
            pl.BlockSpec((1, 1, S), lambda b: (b, 0, 0)),        # additive mask
            _const_spec((H, 3 * H), 1, single_buffer_weights),   # Wqkv (bf16)
            _const_spec((1, 3 * H), 1, False),                   # bqkv (f32)
        ],
        out_specs=pl.BlockSpec((1, S, H), lambda b: (b, 0, 0)),
        out_shape=jax.ShapeDtypeStruct((B, S, H), jnp.bfloat16),
        compiler_params=pltpu.CompilerParams(
            dimension_semantics=("parallel",),
            vmem_limit_bytes=vmem_limit),
        cost_estimate=cost_attn,
    )(hidden, mask_add, lp["wqkv"], lp["bqkv"])

    n_st = S // seq_tile
    cost_ffn = pl.CostEstimate(
        flops=int(2 * B * S * H * H + 4 * B * S * H * I),
        transcendentals=int(B * S * I),
        bytes_accessed=int(B * S * H * (4 + 2 + 4) + (H * H + 2 * H * I) * 2),
    )

    out = pl.pallas_call(
        _output_ffn_kernel,
        grid=(B, n_st),
        in_specs=[
            pl.BlockSpec((1, seq_tile, H), lambda b, s: (b, s, 0)),  # hidden
            pl.BlockSpec((1, seq_tile, H), lambda b, s: (b, s, 0)),  # ctx (bf16)
            _const_spec((H, H), 2, single_buffer_weights),           # Wo (bf16)
            _const_spec((1, H), 2, False),                           # bo
            _const_spec((1, H), 2, False),                           # ln1 gamma
            _const_spec((1, H), 2, False),                           # ln1 beta
            _const_spec((H, I), 2, single_buffer_weights),           # Wi (bf16)
            _const_spec((1, I), 2, False),                           # bi
            _const_spec((I, H), 2, single_buffer_weights),           # Wo2 (bf16)
            _const_spec((1, H), 2, False),                           # bo2
            _const_spec((1, H), 2, False),                           # ln2 gamma
            _const_spec((1, H), 2, False),                           # ln2 beta
        ],
        out_specs=pl.BlockSpec((1, seq_tile, H), lambda b, s: (b, s, 0)),
        out_shape=jax.ShapeDtypeStruct((B, S, H), jnp.float32),
        compiler_params=pltpu.CompilerParams(
            dimension_semantics=("parallel", "parallel"),
            vmem_limit_bytes=vmem_limit),
        cost_estimate=cost_ffn,
    )(hidden, ctx, lp["wo"], lp["bo"], lp["ln1_g"], lp["ln1_b"],
      lp["wi"], lp["bi"], lp["wo2"], lp["bo2"], lp["ln2_g"], lp["ln2_b"])
    return out


def _forward(hidden_states, mask_add, kernel_params, head_num, head_size,
             seq_tile, single_buffer_weights):
    vmem_limit = _vmem_limit_bytes()
    h = hidden_states
    for lp in kernel_params:
        h = _bert_layer(h, mask_add, lp, head_num, head_size, seq_tile,
                        vmem_limit, single_buffer_weights)
    return (h,)


def hugging_face_encoder_forward(hidden_states, attention_mask, kernel_params,
                                 head_num, head_size):
    """Equivalent of HuggingFaceEncoder.forward. Returns (last_hidden_state,)."""
    B, S, H = hidden_states.shape
    # Precompute the additive mask once (outside the kernels / head loop).
    mask_add = ((1.0 - attention_mask.astype(jnp.float32)) * -10000.0
                ).reshape(B, 1, S)
    seq_tile = _pick_seq_tile(S)
    try:
        return _forward(hidden_states, mask_add, kernel_params, head_num,
                        head_size, seq_tile, single_buffer_weights=True)
    except Exception:
        # Fallback if this jax build rejects pl.Buffered(1) on a BlockSpec:
        # identical math, default (double) buffering of the resident weights.
        return _forward(hidden_states, mask_add, kernel_params, head_num,
                        head_size, seq_tile, single_buffer_weights=False)


# ------------------------ pure-JAX reference (f32) ---------------------------


def _ref_forward(hidden_states, attention_mask, params, nh, hs):
    B, S, H = hidden_states.shape
    ext = (1.0 - attention_mask.astype(jnp.float32)) * -10000.0  # [B,1,1,S]
    x = hidden_states
    for lp in params:
        qkv = x @ lp["wqkv"] + lp["bqkv"][0]
        q, k, v = jnp.split(qkv, 3, axis=-1)
        q = q.reshape(B, S, nh, hs).transpose(0, 2, 1, 3)
        k = k.reshape(B, S, nh, hs).transpose(0, 2, 1, 3)
        v = v.reshape(B, S, nh, hs).transpose(0, 2, 1, 3)
        scores = jnp.einsum("bhqd,bhkd->bhqk", q, k) / math.sqrt(hs) + ext
        p = jax.nn.softmax(scores, axis=-1)
        ctx = jnp.einsum("bhqk,bhkd->bhqd", p, v)
        ctx = ctx.transpose(0, 2, 1, 3).reshape(B, S, H)
        a = ctx @ lp["wo"] + lp["bo"][0]
        r1 = a + x
        mu = jnp.mean(r1, -1, keepdims=True)
        var = jnp.mean((r1 - mu) ** 2, -1, keepdims=True)
        h = (r1 - mu) / jnp.sqrt(var + LN_EPS) * lp["ln1_g"][0] + lp["ln1_b"][0]
        inter = jax.nn.gelu(h @ lp["wi"] + lp["bi"][0], approximate=False)
        o = inter @ lp["wo2"] + lp["bo2"][0]
        r2 = o + h
        mu = jnp.mean(r2, -1, keepdims=True)
        var = jnp.mean((r2 - mu) ** 2, -1, keepdims=True)
        x = (r2 - mu) / jnp.sqrt(var + LN_EPS) * lp["ln2_g"][0] + lp["ln2_b"][0]
    return (x,)


# ----------------------------- param init -----------------------------------


def init_params(key, layer_num, head_num, head_size):
    """f32 parameters in "math" layout ([in, out]); QKV fused as [H, 3H]."""
    H = head_num * head_size
    I = 4 * H
    params = []
    for _ in range(layer_num):
        keys = jax.random.split(key, 10)
        key = keys[0]
        lp = {
            "wqkv": jax.random.normal(keys[1], (H, 3 * H), jnp.float32) * 0.02,
            "bqkv": jax.random.normal(keys[2], (1, 3 * H), jnp.float32) * 0.02,
            "wo": jax.random.normal(keys[3], (H, H), jnp.float32) * 0.02,
            "bo": jax.random.normal(keys[4], (1, H), jnp.float32) * 0.02,
            "ln1_g": 1.0 + jax.random.normal(keys[5], (1, H), jnp.float32) * 0.02,
            "ln1_b": jax.random.normal(keys[6], (1, H), jnp.float32) * 0.02,
            "wi": jax.random.normal(keys[7], (H, I), jnp.float32) * 0.02,
            "bi": jax.random.normal(keys[8], (1, I), jnp.float32) * 0.02,
            "wo2": jax.random.normal(keys[9], (I, H), jnp.float32) * 0.02,
            "bo2": jnp.zeros((1, H), jnp.float32),
            "ln2_g": jnp.ones((1, H), jnp.float32),
            "ln2_b": jnp.zeros((1, H), jnp.float32),
        }
        params.append(lp)
    return params


def to_kernel_params(params, head_num, head_size):
    """One-time weight prep: fold 1/sqrt(hs) into the Q columns of Wqkv/bqkv
    and cast MXU weight operands to bf16; biases / LN params stay f32."""
    H = head_num * head_size
    scale = 1.0 / math.sqrt(head_size)
    kparams = []
    for lp in params:
        d = dict(lp)
        d["wqkv"] = lp["wqkv"].at[:, :H].multiply(scale).astype(jnp.bfloat16)
        d["bqkv"] = lp["bqkv"].at[:, :H].multiply(scale)      # f32 bias
        for name in ("wo", "wi", "wo2"):
            d[name] = lp[name].astype(jnp.bfloat16)
        kparams.append(d)
    return kparams


# --------------------------------- main --------------------------------------


if __name__ == "__main__":
    layer_num, head_num, head_size = 2, 4, 8
    B, S = 2, 8
    H = head_num * head_size

    key = jax.random.PRNGKey(0)
    k_h, k_p = jax.random.split(key)
    hidden_states = jax.random.normal(k_h, (B, S, H), jnp.float32)
    # HF-style [B, 1, 1, S] padding mask: batch 1 has the last 2 tokens masked.
    attention_mask = jnp.ones((B, 1, 1, S), jnp.float32)
    attention_mask = attention_mask.at[1, :, :, S - 2:].set(0.0)

    params = init_params(k_p, layer_num, head_num, head_size)
    kparams = to_kernel_params(params, head_num, head_size)

    out = hugging_face_encoder_forward(hidden_states, attention_mask, kparams,
                                       head_num, head_size)
    out = jax.block_until_ready(out)

    ref = _ref_forward(hidden_states, attention_mask, params,
                       head_num, head_size)
    diff = float(jnp.max(jnp.abs(out[0] - ref[0])))
    # bf16 MXU operands / bf16 softmax numerator vs f32 reference: ~1e-3 error.
    assert np.isfinite(diff) and diff < 2e-2, f"mismatch vs reference: {diff}"

    print("KERNEL_OK")
</pallas_src>

<mosaic_0001>
module attributes {stable_mosaic.version = 11 : i64} {
  func.func @_attention_kernel(%arg0: i32, %arg1: memref<1x8x32xf32, #tpu.memory_space<vmem>>, %arg2: memref<1x1x8xf32, #tpu.memory_space<vmem>>, %arg3: memref<32x96xbf16, #tpu.memory_space<vmem>>, %arg4: memref<1x96xf32, #tpu.memory_space<vmem>>, %arg5: memref<1x8x32xbf16, #tpu.memory_space<vmem>>) attributes {dimension_semantics = [#tpu.dimension_semantics<parallel>], iteration_bounds = array<i64: 2>, scalar_prefetch = 0 : i64, scratch_operands = 0 : i64, tpu.core_type = #tpu.core_type<tc>, window_params = [{transform_indices = @transform_0, window_bounds = array<i64: 1, 8, 32>}, {transform_indices = @transform_1, window_bounds = array<i64: 1, 1, 8>}, {pipeline_mode = #tpu.pipeline_mode<synchronous>, transform_indices = @transform_2, window_bounds = array<i64: 32, 96>}, {pipeline_mode = #tpu.pipeline_mode<synchronous>, transform_indices = @transform_3, window_bounds = array<i64: 1, 96>}, {transform_indices = @transform_4, window_bounds = array<i64: 1, 8, 32>}]} {
    %c0 = arith.constant 0 : index
    %c0_0 = arith.constant 0 : index
    %c0_1 = arith.constant 0 : index
    %0 = vector.load %arg1[%c0, %c0_0, %c0_1] : memref<1x8x32xf32, #tpu.memory_space<vmem>>, vector<1x8x32xf32>
    %1 = vector.shape_cast %0 : vector<1x8x32xf32> to vector<8x32xf32>
    %c0_2 = arith.constant 0 : index
    %c0_3 = arith.constant 0 : index
    %c0_4 = arith.constant 0 : index
    %2 = vector.load %arg2[%c0_2, %c0_3, %c0_4] : memref<1x1x8xf32, #tpu.memory_space<vmem>>, vector<1x1x8xf32>
    %3 = vector.shape_cast %2 : vector<1x1x8xf32> to vector<1x8xf32>
    %4 = arith.truncf %1 : vector<8x32xf32> to vector<8x32xbf16>
    %c0_5 = arith.constant 0 : index
    %c0_6 = arith.constant 0 : index
    %5 = vector.load %arg3[%c0_5, %c0_6] : memref<32x96xbf16, #tpu.memory_space<vmem>>, vector<32x96xbf16>
    %cst = arith.constant dense<0.000000e+00> : vector<8x96xf32>
    %6 = tpu.matmul %4, %5, %cst {dimension_numbers = #tpu.dot_dimension_numbers<[1], [0], [0], [1], [0, 0, 1, 1], [], []>} : vector<8x32xbf16>, vector<32x96xbf16>, vector<8x96xf32> -> vector<8x96xf32>
    %c0_7 = arith.constant 0 : index
    %c0_8 = arith.constant 0 : index
    %7 = vector.load %arg4[%c0_7, %c0_8] : memref<1x96xf32, #tpu.memory_space<vmem>>, vector<1x96xf32>
    %8 = vector.broadcast %7 : vector<1x96xf32> to vector<8x96xf32>
    %9 = arith.addf %6, %8 : vector<8x96xf32>
    %10 = arith.truncf %9 : vector<8x96xf32> to vector<8x96xbf16>
    %11 = vector.extract_strided_slice %10 {offsets = [0, 0], sizes = [8, 8], strides = [1, 1]} : vector<8x96xbf16> to vector<8x8xbf16>
    %12 = vector.extract_strided_slice %10 {offsets = [0, 32], sizes = [8, 8], strides = [1, 1]} : vector<8x96xbf16> to vector<8x8xbf16>
    %13 = vector.extract_strided_slice %10 {offsets = [0, 64], sizes = [8, 8], strides = [1, 1]} : vector<8x96xbf16> to vector<8x8xbf16>
    %cst_9 = arith.constant dense<0.000000e+00> : vector<8x8xf32>
    %14 = tpu.matmul %11, %12, %cst_9 {dimension_numbers = #tpu.dot_dimension_numbers<[1], [1], [0], [0], [0, 0, 1, 0], [], []>} : vector<8x8xbf16>, vector<8x8xbf16>, vector<8x8xf32> -> vector<8x8xf32>
    %15 = vector.broadcast %3 : vector<1x8xf32> to vector<8x8xf32>
    %16 = arith.addf %14, %15 : vector<8x8xf32>
    %cst_10 = arith.constant dense<0xFF800000> : vector<8xf32>
    %17 = vector.multi_reduction <maximumf>, %16, %cst_10 [1] : vector<8x8xf32> to vector<8xf32>
    %18 = vector.shape_cast %17 : vector<8xf32> to vector<8x1xf32>
    %19 = vector.broadcast %18 : vector<8x1xf32> to vector<8x8xf32>
    %20 = arith.subf %16, %19 : vector<8x8xf32>
    %21 = arith.truncf %20 : vector<8x8xf32> to vector<8x8xbf16>
    %22 = math.exp %21 : vector<8x8xbf16>
    %23 = arith.extf %22 : vector<8x8xbf16> to vector<8x8xf32>
    %cst_11 = arith.constant dense<0.000000e+00> : vector<8xf32>
    %24 = vector.multi_reduction <add>, %23, %cst_11 [1] : vector<8x8xf32> to vector<8xf32>
    %25 = vector.shape_cast %24 : vector<8xf32> to vector<8x1xf32>
    %cst_12 = arith.constant dense<0.000000e+00> : vector<8x8xf32>
    %26 = tpu.matmul %22, %13, %cst_12 {dimension_numbers = #tpu.dot_dimension_numbers<[1], [0], [0], [1], [0, 0, 1, 1], [], []>} : vector<8x8xbf16>, vector<8x8xbf16>, vector<8x8xf32> -> vector<8x8xf32>
    %27 = tpu.reciprocal %25 {approx = true} : vector<8x1xf32> -> vector<8x1xf32>
    %28 = vector.broadcast %27 : vector<8x1xf32> to vector<8x8xf32>
    %29 = arith.mulf %26, %28 : vector<8x8xf32>
    %30 = vector.extract_strided_slice %10 {offsets = [0, 8], sizes = [8, 8], strides = [1, 1]} : vector<8x96xbf16> to vector<8x8xbf16>
    %31 = vector.extract_strided_slice %10 {offsets = [0, 40], sizes = [8, 8], strides = [1, 1]} : vector<8x96xbf16> to vector<8x8xbf16>
    %32 = vector.extract_strided_slice %10 {offsets = [0, 72], sizes = [8, 8], strides = [1, 1]} : vector<8x96xbf16> to vector<8x8xbf16>
    %cst_13 = arith.constant dense<0.000000e+00> : vector<8x8xf32>
    %33 = tpu.matmul %30, %31, %cst_13 {dimension_numbers = #tpu.dot_dimension_numbers<[1], [1], [0], [0], [0, 0, 1, 0], [], []>} : vector<8x8xbf16>, vector<8x8xbf16>, vector<8x8xf32> -> vector<8x8xf32>
    %34 = vector.broadcast %3 : vector<1x8xf32> to vector<8x8xf32>
    %35 = arith.addf %33, %34 : vector<8x8xf32>
    %cst_14 = arith.constant dense<0xFF800000> : vector<8xf32>
    %36 = vector.multi_reduction <maximumf>, %35, %cst_14 [1] : vector<8x8xf32> to vector<8xf32>
    %37 = vector.shape_cast %36 : vector<8xf32> to vector<8x1xf32>
    %38 = vector.broadcast %37 : vector<8x1xf32> to vector<8x8xf32>
    %39 = arith.subf %35, %38 : vector<8x8xf32>
    %40 = arith.truncf %39 : vector<8x8xf32> to vector<8x8xbf16>
    %41 = math.exp %40 : vector<8x8xbf16>
    %42 = arith.extf %41 : vector<8x8xbf16> to vector<8x8xf32>
    %cst_15 = arith.constant dense<0.000000e+00> : vector<8xf32>
    %43 = vector.multi_reduction <add>, %42, %cst_15 [1] : vector<8x8xf32> to vector<8xf32>
    %44 = vector.shape_cast %43 : vector<8xf32> to vector<8x1xf32>
    %cst_16 = arith.constant dense<0.000000e+00> : vector<8x8xf32>
    %45 = tpu.matmul %41, %32, %cst_16 {dimension_numbers = #tpu.dot_dimension_numbers<[1], [0], [0], [1], [0, 0, 1, 1], [], []>} : vector<8x8xbf16>, vector<8x8xbf16>, vector<8x8xf32> -> vector<8x8xf32>
    %46 = tpu.reciprocal %44 {approx = true} : vector<8x1xf32> -> vector<8x1xf32>
    %47 = vector.broadcast %46 : vector<8x1xf32> to vector<8x8xf32>
    %48 = arith.mulf %45, %47 : vector<8x8xf32>
    %49 = vector.extract_strided_slice %10 {offsets = [0, 16], sizes = [8, 8], strides = [1, 1]} : vector<8x96xbf16> to vector<8x8xbf16>
    %50 = vector.extract_strided_slice %10 {offsets = [0, 48], sizes = [8, 8], strides = [1, 1]} : vector<8x96xbf16> to vector<8x8xbf16>
    %51 = vector.extract_strided_slice %10 {offsets = [0, 80], sizes = [8, 8], strides = [1, 1]} : vector<8x96xbf16> to vector<8x8xbf16>
    %cst_17 = arith.constant dense<0.000000e+00> : vector<8x8xf32>
    %52 = tpu.matmul %49, %50, %cst_17 {dimension_numbers = #tpu.dot_dimension_numbers<[1], [1], [0], [0], [0, 0, 1, 0], [], []>} : vector<8x8xbf16>, vector<8x8xbf16>, vector<8x8xf32> -> vector<8x8xf32>
    %53 = vector.broadcast %3 : vector<1x8xf32> to vector<8x8xf32>
    %54 = arith.addf %52, %53 : vector<8x8xf32>
    %cst_18 = arith.constant dense<0xFF800000> : vector<8xf32>
    %55 = vector.multi_reduction <maximumf>, %54, %cst_18 [1] : vector<8x8xf32> to vector<8xf32>
    %56 = vector.shape_cast %55 : vector<8xf32> to vector<8x1xf32>
    %57 = vector.broadcast %56 : vector<8x1xf32> to vector<8x8xf32>
    %58 = arith.subf %54, %57 : vector<8x8xf32>
    %59 = arith.truncf %58 : vector<8x8xf32> to vector<8x8xbf16>
    %60 = math.exp %59 : vector<8x8xbf16>
    %61 = arith.extf %60 : vector<8x8xbf16> to vector<8x8xf32>
    %cst_19 = arith.constant dense<0.000000e+00> : vector<8xf32>
    %62 = vector.multi_reduction <add>, %61, %cst_19 [1] : vector<8x8xf32> to vector<8xf32>
    %63 = vector.shape_cast %62 : vector<8xf32> to vector<8x1xf32>
    %cst_20 = arith.constant dense<0.000000e+00> : vector<8x8xf32>
    %64 = tpu.matmul %60, %51, %cst_20 {dimension_numbers = #tpu.dot_dimension_numbers<[1], [0], [0], [1], [0, 0, 1, 1], [], []>} : vector<8x8xbf16>, vector<8x8xbf16>, vector<8x8xf32> -> vector<8x8xf32>
    %65 = tpu.reciprocal %63 {approx = true} : vector<8x1xf32> -> vector<8x1xf32>
    %66 = vector.broadcast %65 : vector<8x1xf32> to vector<8x8xf32>
    %67 = arith.mulf %64, %66 : vector<8x8xf32>
    %68 = vector.extract_strided_slice %10 {offsets = [0, 24], sizes = [8, 8], strides = [1, 1]} : vector<8x96xbf16> to vector<8x8xbf16>
    %69 = vector.extract_strided_slice %10 {offsets = [0, 56], sizes = [8, 8], strides = [1, 1]} : vector<8x96xbf16> to vector<8x8xbf16>
    %70 = vector.extract_strided_slice %10 {offsets = [0, 88], sizes = [8, 8], strides = [1, 1]} : vector<8x96xbf16> to vector<8x8xbf16>
    %cst_21 = arith.constant dense<0.000000e+00> : vector<8x8xf32>
    %71 = tpu.matmul %68, %69, %cst_21 {dimension_numbers = #tpu.dot_dimension_numbers<[1], [1], [0], [0], [0, 0, 1, 0], [], []>} : vector<8x8xbf16>, vector<8x8xbf16>, vector<8x8xf32> -> vector<8x8xf32>
    %72 = vector.broadcast %3 : vector<1x8xf32> to vector<8x8xf32>
    %73 = arith.addf %71, %72 : vector<8x8xf32>
    %cst_22 = arith.constant dense<0xFF800000> : vector<8xf32>
    %74 = vector.multi_reduction <maximumf>, %73, %cst_22 [1] : vector<8x8xf32> to vector<8xf32>
    %75 = vector.shape_cast %74 : vector<8xf32> to vector<8x1xf32>
    %76 = vector.broadcast %75 : vector<8x1xf32> to vector<8x8xf32>
    %77 = arith.subf %73, %76 : vector<8x8xf32>
    %78 = arith.truncf %77 : vector<8x8xf32> to vector<8x8xbf16>
    %79 = math.exp %78 : vector<8x8xbf16>
    %80 = arith.extf %79 : vector<8x8xbf16> to vector<8x8xf32>
    %cst_23 = arith.constant dense<0.000000e+00> : vector<8xf32>
    %81 = vector.multi_reduction <add>, %80, %cst_23 [1] : vector<8x8xf32> to vector<8xf32>
    %82 = vector.shape_cast %81 : vector<8xf32> to vector<8x1xf32>
    %cst_24 = arith.constant dense<0.000000e+00> : vector<8x8xf32>
    %83 = tpu.matmul %79, %70, %cst_24 {dimension_numbers = #tpu.dot_dimension_numbers<[1], [0], [0], [1], [0, 0, 1, 1], [], []>} : vector<8x8xbf16>, vector<8x8xbf16>, vector<8x8xf32> -> vector<8x8xf32>
    %84 = tpu.reciprocal %82 {approx = true} : vector<8x1xf32> -> vector<8x1xf32>
    %85 = vector.broadcast %84 : vector<8x1xf32> to vector<8x8xf32>
    %86 = arith.mulf %83, %85 : vector<8x8xf32>
    %87 = tpu.concatenate %29, %48, %67, %86 in 1 : vector<8x8xf32>, vector<8x8xf32>, vector<8x8xf32>, vector<8x8xf32> -> vector<8x32xf32>
    %88 = arith.truncf %87 : vector<8x32xf32> to vector<8x32xbf16>
    %c0_25 = arith.constant 0 : index
    %c0_26 = arith.constant 0 : index
    %c0_27 = arith.constant 0 : index
    %89 = vector.load %arg5[%c0_25, %c0_26, %c0_27] : memref<1x8x32xbf16, #tpu.memory_space<vmem>>, vector<1x8x32xbf16>
    %90 = vector.shape_cast %89 : vector<1x8x32xbf16> to vector<8x32xbf16>
    %91 = vector.shape_cast %88 : vector<8x32xbf16> to vector<1x8x32xbf16>
    tpu.vector_store %arg5[%c0_25, %c0_26, %c0_27], %91 {strides = array<i32>} : memref<1x8x32xbf16, #tpu.memory_space<vmem>>, vector<1x8x32xbf16>,
    return
  }
  func.func @transform_0(%arg0: i32) -> (i32, i32, i32) {
    %c0_i32 = arith.constant 0 : i32
    %c0_i32_0 = arith.constant 0 : i32
    %c0_i32_1 = arith.constant 0 : i32
    return %arg0, %c0_i32, %c0_i32_0 : i32, i32, i32
  }
  func.func @transform_1(%arg0: i32) -> (i32, i32, i32) {
    %c0_i32 = arith.constant 0 : i32
    %c0_i32_0 = arith.constant 0 : i32
    %c0_i32_1 = arith.constant 0 : i32
    return %arg0, %c0_i32, %c0_i32_0 : i32, i32, i32
  }
  func.func @transform_2(%arg0: i32) -> (i32, i32) {
    %c0_i32 = arith.constant 0 : i32
    %c0_i32_0 = arith.constant 0 : i32
    %c0_i32_1 = arith.constant 0 : i32
    return %c0_i32, %c0_i32_0 : i32, i32
  }
  func.func @transform_3(%arg0: i32) -> (i32, i32) {
    %c0_i32 = arith.constant 0 : i32
    %c0_i32_0 = arith.constant 0 : i32
    %c0_i32_1 = arith.constant 0 : i32
    return %c0_i32, %c0_i32_0 : i32, i32
  }
  func.func @transform_4(%arg0: i32) -> (i32, i32, i32) {
    %c0_i32 = arith.constant 0 : i32
    %c0_i32_0 = arith.constant 0 : i32
    %c0_i32_1 = arith.constant 0 : i32
    return %arg0, %c0_i32, %c0_i32_0 : i32, i32, i32
  }
}

module attributes {stable_mosaic.version = 11 : i64} {
  func.func @_attention_kernel(%arg0: i32, %arg1: memref<1x8x32xf32, #tpu.memory_space<vmem>>, %arg2: memref<1x1x8xf32, #tpu.memory_space<vmem>>, %arg3: memref<32x96xbf16, #tpu.memory_space<vmem>>, %arg4: memref<1x96xf32, #tpu.memory_space<vmem>>, %arg5: memref<1x8x32xbf16, #tpu.memory_space<vmem>>) attributes {dimension_semantics = [#tpu.dimension_semantics<parallel>], iteration_bounds = array<i64: 2>, scalar_prefetch = 0 : i64, scratch_operands = 0 : i64, tpu.core_type = #tpu.core_type<tc>, window_params = [{transform_indices = @transform_0, window_bounds = array<i64: 1, 8, 32>}, {transform_indices = @transform_1, window_bounds = array<i64: 1, 1, 8>}, {pipeline_mode = #tpu.pipeline_mode<synchronous>, transform_indices = @transform_2, window_bounds = array<i64: 32, 96>}, {pipeline_mode = #tpu.pipeline_mode<synchronous>, transform_indices = @transform_3, window_bounds = array<i64: 1, 96>}, {transform_indices = @transform_4, window_bounds = array<i64: 1, 8, 32>}]} {
    %c0 = arith.constant 0 : index
    %c0_0 = arith.constant 0 : index
    %c0_1 = arith.constant 0 : index
    %0 = vector.load %arg1[%c0, %c0_0, %c0_1] : memref<1x8x32xf32, #tpu.memory_space<vmem>>, vector<1x8x32xf32>
    %1 = vector.shape_cast %0 : vector<1x8x32xf32> to vector<8x32xf32>
    %c0_2 = arith.constant 0 : index
    %c0_3 = arith.constant 0 : index
    %c0_4 = arith.constant 0 : index
    %2 = vector.load %arg2[%c0_2, %c0_3, %c0_4] : memref<1x1x8xf32, #tpu.memory_space<vmem>>, vector<1x1x8xf32>
    %3 = vector.shape_cast %2 : vector<1x1x8xf32> to vector<1x8xf32>
    %4 = arith.truncf %1 : vector<8x32xf32> to vector<8x32xbf16>
    %c0_5 = arith.constant 0 : index
    %c0_6 = arith.constant 0 : index
    %5 = vector.load %arg3[%c0_5, %c0_6] : memref<32x96xbf16, #tpu.memory_space<vmem>>, vector<32x96xbf16>
    %cst = arith.constant dense<0.000000e+00> : vector<8x96xf32>
    %6 = tpu.matmul %4, %5, %cst {dimension_numbers = #tpu.dot_dimension_numbers<[1], [0], [0], [1], [0, 0, 1, 1], [], []>} : vector<8x32xbf16>, vector<32x96xbf16>, vector<8x96xf32> -> vector<8x96xf32>
    %c0_7 = arith.constant 0 : index
    %c0_8 = arith.constant 0 : index
    %7 = vector.load %arg4[%c0_7, %c0_8] : memref<1x96xf32, #tpu.memory_space<vmem>>, vector<1x96xf32>
    %8 = vector.broadcast %7 : vector<1x96xf32> to vector<8x96xf32>
    %9 = arith.addf %6, %8 : vector<8x96xf32>
    %10 = arith.truncf %9 : vector<8x96xf32> to vector<8x96xbf16>
    %11 = vector.extract_strided_slice %10 {offsets = [0, 0], sizes = [8, 8], strides = [1, 1]} : vector<8x96xbf16> to vector<8x8xbf16>
    %12 = vector.extract_strided_slice %10 {offsets = [0, 32], sizes = [8, 8], strides = [1, 1]} : vector<8x96xbf16> to vector<8x8xbf16>
    %13 = vector.extract_strided_slice %10 {offsets = [0, 64], sizes = [8, 8], strides = [1, 1]} : vector<8x96xbf16> to vector<8x8xbf16>
    %cst_9 = arith.constant dense<0.000000e+00> : vector<8x8xf32>
    %14 = tpu.matmul %11, %12, %cst_9 {dimension_numbers = #tpu.dot_dimension_numbers<[1], [1], [0], [0], [0, 0, 1, 0], [], []>} : vector<8x8xbf16>, vector<8x8xbf16>, vector<8x8xf32> -> vector<8x8xf32>
    %15 = vector.broadcast %3 : vector<1x8xf32> to vector<8x8xf32>
    %16 = arith.addf %14, %15 : vector<8x8xf32>
    %cst_10 = arith.constant dense<0xFF800000> : vector<8xf32>
    %17 = vector.multi_reduction <maximumf>, %16, %cst_10 [1] : vector<8x8xf32> to vector<8xf32>
    %18 = vector.shape_cast %17 : vector<8xf32> to vector<8x1xf32>
    %19 = vector.broadcast %18 : vector<8x1xf32> to vector<8x8xf32>
    %20 = arith.subf %16, %19 : vector<8x8xf32>
    %21 = arith.truncf %20 : vector<8x8xf32> to vector<8x8xbf16>
    %22 = math.exp %21 : vector<8x8xbf16>
    %23 = arith.extf %22 : vector<8x8xbf16> to vector<8x8xf32>
    %cst_11 = arith.constant dense<0.000000e+00> : vector<8xf32>
    %24 = vector.multi_reduction <add>, %23, %cst_11 [1] : vector<8x8xf32> to vector<8xf32>
    %25 = vector.shape_cast %24 : vector<8xf32> to vector<8x1xf32>
    %cst_12 = arith.constant dense<0.000000e+00> : vector<8x8xf32>
    %26 = tpu.matmul %22, %13, %cst_12 {dimension_numbers = #tpu.dot_dimension_numbers<[1], [0], [0], [1], [0, 0, 1, 1], [], []>} : vector<8x8xbf16>, vector<8x8xbf16>, vector<8x8xf32> -> vector<8x8xf32>
    %27 = tpu.reciprocal %25 {approx = true} : vector<8x1xf32> -> vector<8x1xf32>
    %28 = vector.broadcast %27 : vector<8x1xf32> to vector<8x8xf32>
    %29 = arith.mulf %26, %28 : vector<8x8xf32>
    %30 = vector.extract_strided_slice %10 {offsets = [0, 8], sizes = [8, 8], strides = [1, 1]} : vector<8x96xbf16> to vector<8x8xbf16>
    %31 = vector.extract_strided_slice %10 {offsets = [0, 40], sizes = [8, 8], strides = [1, 1]} : vector<8x96xbf16> to vector<8x8xbf16>
    %32 = vector.extract_strided_slice %10 {offsets = [0, 72], sizes = [8, 8], strides = [1, 1]} : vector<8x96xbf16> to vector<8x8xbf16>
    %cst_13 = arith.constant dense<0.000000e+00> : vector<8x8xf32>
    %33 = tpu.matmul %30, %31, %cst_13 {dimension_numbers = #tpu.dot_dimension_numbers<[1], [1], [0], [0], [0, 0, 1, 0], [], []>} : vector<8x8xbf16>, vector<8x8xbf16>, vector<8x8xf32> -> vector<8x8xf32>
    %34 = vector.broadcast %3 : vector<1x8xf32> to vector<8x8xf32>
    %35 = arith.addf %33, %34 : vector<8x8xf32>
    %cst_14 = arith.constant dense<0xFF800000> : vector<8xf32>
    %36 = vector.multi_reduction <maximumf>, %35, %cst_14 [1] : vector<8x8xf32> to vector<8xf32>
    %37 = vector.shape_cast %36 : vector<8xf32> to vector<8x1xf32>
    %38 = vector.broadcast %37 : vector<8x1xf32> to vector<8x8xf32>
    %39 = arith.subf %35, %38 : vector<8x8xf32>
    %40 = arith.truncf %39 : vector<8x8xf32> to vector<8x8xbf16>
    %41 = math.exp %40 : vector<8x8xbf16>
    %42 = arith.extf %41 : vector<8x8xbf16> to vector<8x8xf32>
    %cst_15 = arith.constant dense<0.000000e+00> : vector<8xf32>
    %43 = vector.multi_reduction <add>, %42, %cst_15 [1] : vector<8x8xf32> to vector<8xf32>
    %44 = vector.shape_cast %43 : vector<8xf32> to vector<8x1xf32>
    %cst_16 = arith.constant dense<0.000000e+00> : vector<8x8xf32>
    %45 = tpu.matmul %41, %32, %cst_16 {dimension_numbers = #tpu.dot_dimension_numbers<[1], [0], [0], [1], [0, 0, 1, 1], [], []>} : vector<8x8xbf16>, vector<8x8xbf16>, vector<8x8xf32> -> vector<8x8xf32>
    %46 = tpu.reciprocal %44 {approx = true} : vector<8x1xf32> -> vector<8x1xf32>
    %47 = vector.broadcast %46 : vector<8x1xf32> to vector<8x8xf32>
    %48 = arith.mulf %45, %47 : vector<8x8xf32>
    %49 = vector.extract_strided_slice %10 {offsets = [0, 16], sizes = [8, 8], strides = [1, 1]} : vector<8x96xbf16> to vector<8x8xbf16>
    %50 = vector.extract_strided_slice %10 {offsets = [0, 48], sizes = [8, 8], strides = [1, 1]} : vector<8x96xbf16> to vector<8x8xbf16>
    %51 = vector.extract_strided_slice %10 {offsets = [0, 80], sizes = [8, 8], strides = [1, 1]} : vector<8x96xbf16> to vector<8x8xbf16>
    %cst_17 = arith.constant dense<0.000000e+00> : vector<8x8xf32>
    %52 = tpu.matmul %49, %50, %cst_17 {dimension_numbers = #tpu.dot_dimension_numbers<[1], [1], [0], [0], [0, 0, 1, 0], [], []>} : vector<8x8xbf16>, vector<8x8xbf16>, vector<8x8xf32> -> vector<8x8xf32>
    %53 = vector.broadcast %3 : vector<1x8xf32> to vector<8x8xf32>
    %54 = arith.addf %52, %53 : vector<8x8xf32>
    %cst_18 = arith.constant dense<0xFF800000> : vector<8xf32>
    %55 = vector.multi_reduction <maximumf>, %54, %cst_18 [1] : vector<8x8xf32> to vector<8xf32>
    %56 = vector.shape_cast %55 : vector<8xf32> to vector<8x1xf32>
    %57 = vector.broadcast %56 : vector<8x1xf32> to vector<8x8xf32>
    %58 = arith.subf %54, %57 : vector<8x8xf32>
    %59 = arith.truncf %58 : vector<8x8xf32> to vector<8x8xbf16>
    %60 = math.exp %59 : vector<8x8xbf16>
    %61 = arith.extf %60 : vector<8x8xbf16> to vector<8x8xf32>
    %cst_19 = arith.constant dense<0.000000e+00> : vector<8xf32>
    %62 = vector.multi_reduction <add>, %61, %cst_19 [1] : vector<8x8xf32> to vector<8xf32>
    %63 = vector.shape_cast %62 : vector<8xf32> to vector<8x1xf32>
    %cst_20 = arith.constant dense<0.000000e+00> : vector<8x8xf32>
    %64 = tpu.matmul %60, %51, %cst_20 {dimension_numbers = #tpu.dot_dimension_numbers<[1], [0], [0], [1], [0, 0, 1, 1], [], []>} : vector<8x8xbf16>, vector<8x8xbf16>, vector<8x8xf32> -> vector<8x8xf32>
    %65 = tpu.reciprocal %63 {approx = true} : vector<8x1xf32> -> vector<8x1xf32>
    %66 = vector.broadcast %65 : vector<8x1xf32> to vector<8x8xf32>
    %67 = arith.mulf %64, %66 : vector<8x8xf32>
    %68 = vector.extract_strided_slice %10 {offsets = [0, 24], sizes = [8, 8], strides = [1, 1]} : vector<8x96xbf16> to vector<8x8xbf16>
    %69 = vector.extract_strided_slice %10 {offsets = [0, 56], sizes = [8, 8], strides = [1, 1]} : vector<8x96xbf16> to vector<8x8xbf16>
    %70 = vector.extract_strided_slice %10 {offsets = [0, 88], sizes = [8, 8], strides = [1, 1]} : vector<8x96xbf16> to vector<8x8xbf16>
    %cst_21 = arith.constant dense<0.000000e+00> : vector<8x8xf32>
    %71 = tpu.matmul %68, %69, %cst_21 {dimension_numbers = #tpu.dot_dimension_numbers<[1], [1], [0], [0], [0, 0, 1, 0], [], []>} : vector<8x8xbf16>, vector<8x8xbf16>, vector<8x8xf32> -> vector<8x8xf32>
    %72 = vector.broadcast %3 : vector<1x8xf32> to vector<8x8xf32>
    %73 = arith.addf %71, %72 : vector<8x8xf32>
    %cst_22 = arith.constant dense<0xFF800000> : vector<8xf32>
    %74 = vector.multi_reduction <maximumf>, %73, %cst_22 [1] : vector<8x8xf32> to vector<8xf32>
    %75 = vector.shape_cast %74 : vector<8xf32> to vector<8x1xf32>
    %76 = vector.broadcast %75 : vector<8x1xf32> to vector<8x8xf32>
    %77 = arith.subf %73, %76 : vector<8x8xf32>
    %78 = arith.truncf %77 : vector<8x8xf32> to vector<8x8xbf16>
    %79 = math.exp %78 : vector<8x8xbf16>
    %80 = arith.extf %79 : vector<8x8xbf16> to vector<8x8xf32>
    %cst_23 = arith.constant dense<0.000000e+00> : vector<8xf32>
    %81 = vector.multi_reduction <add>, %80, %cst_23 [1] : vector<8x8xf32> to vector<8xf32>
    %82 = vector.shape_cast %81 : vector<8xf32> to vector<8x1xf32>
    %cst_24 = arith.constant dense<0.000000e+00> : vector<8x8xf32>
    %83 = tpu.matmul %79, %70, %cst_24 {dimension_numbers = #tpu.dot_dimension_numbers<[1], [0], [0], [1], [0, 0, 1, 1], [], []>} : vector<8x8xbf16>, vector<8x8xbf16>, vector<8x8xf32> -> vector<8x8xf32>
    %84 = tpu.reciprocal %82 {approx = true} : vector<8x1xf32> -> vector<8x1xf32>
    %85 = vector.broadcast %84 : vector<8x1xf32> to vector<8x8xf32>
    %86 = arith.mulf %83, %85 : vector<8x8xf32>
    %87 = tpu.concatenate %29, %48, %67, %86 in 1 : vector<8x8xf32>, vector<8x8xf32>, vector<8x8xf32>, vector<8x8xf32> -> vector<8x32xf32>
    %88 = arith.truncf %87 : vector<8x32xf32> to vector<8x32xbf16>
    %c0_25 = arith.constant 0 : index
    %c0_26 = arith.constant 0 : index
    %c0_27 = arith.constant 0 : index
    %89 = vector.load %arg5[%c0_25, %c0_26, %c0_27] : memref<1x8x32xbf16, #tpu.memory_space<vmem>>, vector<1x8x32xbf16>
    %90 = vector.shape_cast %89 : vector<1x8x32xbf16> to vector<8x32xbf16>
    %91 = vector.shape_cast %88 : vector<8x32xbf16> to vector<1x8x32xbf16>
    tpu.vector_store %arg5[%c0_25, %c0_26, %c0_27], %91 {strides = array<i32>} : memref<1x8x32xbf16, #tpu.memory_space<vmem>>, vector<1x8x32xbf16>,
    return
  }
  func.func @transform_0(%arg0: i32) -> (i32, i32, i32) {
    %c0_i32 = arith.constant 0 : i32
    %c0_i32_0 = arith.constant 0 : i32
    %c0_i32_1 = arith.constant 0 : i32
    return %arg0, %c0_i32, %c0_i32_0 : i32, i32, i32
  }
  func.func @transform_1(%arg0: i32) -> (i32, i32, i32) {
    %c0_i32 = arith.constant 0 : i32
    %c0_i32_0 = arith.constant 0 : i32
    %c0_i32_1 = arith.constant 0 : i32
    return %arg0, %c0_i32, %c0_i32_0 : i32, i32, i32
  }
  func.func @transform_2(%arg0: i32) -> (i32, i32) {
    %c0_i32 = arith.constant 0 : i32
    %c0_i32_0 = arith.constant 0 : i32
    %c0_i32_1 = arith.constant 0 : i32
    return %c0_i32, %c0_i32_0 : i32, i32
  }
  func.func @transform_3(%arg0: i32) -> (i32, i32) {
    %c0_i32 = arith.constant 0 : i32
    %c0_i32_0 = arith.constant 0 : i32
    %c0_i32_1 = arith.constant 0 : i32
    return %c0_i32, %c0_i32_0 : i32, i32
  }
  func.func @transform_4(%arg0: i32) -> (i32, i32, i32) {
    %c0_i32 = arith.constant 0 : i32
    %c0_i32_0 = arith.constant 0 : i32
    %c0_i32_1 = arith.constant 0 : i32
    return %arg0, %c0_i32, %c0_i32_0 : i32, i32, i32
  }
}

</mosaic_0001>

<llo_original>
// kernel: tpu_custom_call.1
$region0: #{tpu_custom_call.1}
  #allocation0 [shape = 'u32[]', space=smem, size = 0x4, offset = 0x4, fixed_abs, tag = 'smem constant byte address 0x4 - core index']
  #allocation1 [shape = 'u32[144,128]{1,0:T(1,128)}', space=vmem, size = 0x12000, scoped, tag = 'internal scratch']
  %s0 = inlined_call_operand.hbm [shape: f32[2,8,32], index: 0, kind: input, shape index: {}]
  %s1 = inlined_call_operand.hbm [shape: f32[2,1,8], index: 1, kind: input, shape index: {}]
  %s2 = inlined_call_operand.hbm [shape: bf16[32,96], index: 2, kind: input, shape index: {}]
  %s3 = inlined_call_operand.vmem [shape: f32[1,96], index: 3, kind: input, shape index: {}]
  %s4 = inlined_call_operand.hbm [shape: bf16[2,8,32], index: 4, kind: output, shape index: {}]
  %s5 = sld [smem:[#allocation0]]
  $region61: #{tpu_custom_call.1} parent=0
    _
  %s7 = ssub.s32 1, %s5
  %s8 = scalar_select 0, %s7, %s5
  $region1: #{tpu_custom_call.1} parent=0
    #allocation2 [shape = 'u8[8192]{0}', space=vmem, size = 0x2000, scoped, tag = 'input window, operand 0']
    #allocation3 [shape = 's32[2]{0}', space=sflag, size = 0x8, scoped, tag = 'scoped memory for tpu_custom_call.1']
    #allocation4 [shape = 's32[2]{0}', space=sflag, size = 0x8, scoped, tag = 'scoped memory for tpu_custom_call.1']
    #allocation5 [shape = 'u8[1024]{0}', space=vmem, size = 0x400, scoped, tag = 'input window, operand 1']
    #allocation6 [shape = 's32[2]{0}', space=sflag, size = 0x8, scoped, tag = 'scoped memory for tpu_custom_call.1']
    #allocation7 [shape = 'u8[8192]{0}', space=vmem, size = 0x2000, scoped, tag = 'input window, operand 2, single buffered']
    #allocation8 [shape = 'u8[4096]{0}', space=vmem, size = 0x1000, scoped, tag = 'output window, operand 0']
    %9 = vsyncpa [#allocation3], 0
    %s10 = scalar_lea.sflag [#allocation3], 1
    %11 = vsyncpa %s10, 0
    %12 = vsyncpa [#allocation6], 0
    %s13 = scalar_lea.sflag [#allocation6], 1
    %14 = vsyncpa %s13, 0
    %15 = vsyncpa [#allocation4], 0
    %s16 = scalar_lea.sflag [#allocation4], 1
    %17 = vsyncpa %s16, 0
    loop: start=0, step=1, limit=4
    $region2: #{tpu_custom_call.1} parent=1 // loop_pre_header
      _
    $region3: #{tpu_custom_call.1} parent=1 // loop_header
      %s19 = sphi 0, %s23
      %p20 = scmp.ge.s32.totalorder %s19, 4
      %s29 = sphi 0, %s31
      %s32 = sphi 0, %s29
      %s33 = sphi 0, %s32
      %s49 = sphi 0, %s33
      %s55 = sphi 0, %s57
      %s58 = sphi 0, %s55
      %s59 = sphi 0, %s58
      %s75 = sphi 0, %s59
      %s79 = sphi 0, %s79
      %s81 = sphi 0, %s79
      %s82 = sphi 0, %s81
      %s96 = sphi 0, %s82
      %s100 = sphi 0, %s100
      %s102 = sphi 0, %s100
      %s103 = sphi 0, %s102
      %s117 = sphi 0, %s103
      %s123 = sphi 0, %s125
      %s126 = sphi 0, %s123
      %s127 = sphi 0, %s126
      %s143 = sphi 0, %s127
    $region4: #{tpu_custom_call.1} parent=1 // loop_header_branch
      %22 = sbr.rel (%p20) target = $region8
    $region5: #{tpu_custom_call.1} parent=1 // loop_body
      %s24 = ssub.s32 %s19, 1
      %s25 = ssub.s32 %s19, 2
      %s26 = sadd.s32 %s19, 1
      %s27 = ssub.s32 %s19, %s26
      %p28 = scmp.eq.s32.totalorder %s27, 0
      %s30 = sadd.s32 %s29, 1
      %s31 = scalar_select %p28, %s29, %s30
      %p34 = pneg %p28
      %p35 = scmp.eq.s32.totalorder %s19, 1
      %p36 = por %p34, %p35
      %p37 = scmp.ne.s32.totalorder %s29, %s32
      %p38 = scmp.eq.s32.totalorder %s19, 0
      %p39 = por %p37, %p38
      %p40 = scmp.ne.s32.totalorder %s29, %s32
      %p41 = scmp.eq.s32.totalorder %s24, 1
      %p42 = por %p40, %p41
      %p43 = scmp.ne.s32.totalorder %s32, %s33
      %p44 = scmp.eq.s32.totalorder %s24, 0
      %p45 = por %p43, %p44
      %p46 = scmp.ne.s32.totalorder %s32, %s33
      %p47 = scmp.eq.s32.totalorder %s25, 1
      %p48 = por %p46, %p47
      %p50 = scmp.ne.s32.totalorder %s33, %s49
      %p51 = scmp.eq.s32.totalorder %s25, 0
      %p52 = por %p50, %p51
      %s53 = ssub.s32 %s19, %s26
      %p54 = scmp.eq.s32.totalorder %s53, 0
      %s56 = sadd.s32 %s55, 1
      %s57 = scalar_select %p54, %s55, %s56
      %p60 = pneg %p54
      %p61 = scmp.eq.s32.totalorder %s19, 1
      %p62 = por %p60, %p61
      %p63 = scmp.ne.s32.totalorder %s55, %s58
      %p64 = scmp.eq.s32.totalorder %s19, 0
      %p65 = por %p63, %p64
      %p66 = scmp.ne.s32.totalorder %s55, %s58
      %p67 = scmp.eq.s32.totalorder %s24, 1
      %p68 = por %p66, %p67
      %p69 = scmp.ne.s32.totalorder %s58, %s59
      %p70 = scmp.eq.s32.totalorder %s24, 0
      %p71 = por %p69, %p70
      %p72 = scmp.ne.s32.totalorder %s58, %s59
      %p73 = scmp.eq.s32.totalorder %s25, 1
      %p74 = por %p72, %p73
      %p76 = scmp.ne.s32.totalorder %s59, %s75
      %p77 = scmp.eq.s32.totalorder %s25, 0
      %p78 = por %p76, %p77
      %s80 = sadd.s32 %s79, 1
      %p83 = scmp.eq.s32.totalorder %s19, 1
      %p84 = scmp.ne.s32.totalorder %s79, %s81
      %p85 = scmp.eq.s32.totalorder %s19, 0
      %p86 = por %p84, %p85
      %p87 = scmp.ne.s32.totalorder %s79, %s81
      %p88 = scmp.eq.s32.totalorder %s24, 1
      %p89 = por %p87, %p88
      %p90 = scmp.ne.s32.totalorder %s81, %s82
      %p91 = scmp.eq.s32.totalorder %s24, 0
      %p92 = por %p90, %p91
      %p93 = scmp.ne.s32.totalorder %s81, %s82
      %p94 = scmp.eq.s32.totalorder %s25, 1
      %p95 = por %p93, %p94
      %p97 = scmp.ne.s32.totalorder %s82, %s96
      %p98 = scmp.eq.s32.totalorder %s25, 0
      %p99 = por %p97, %p98
      %s101 = sadd.s32 %s100, 1
      %p104 = scmp.eq.s32.totalorder %s19, 1
      %p105 = scmp.ne.s32.totalorder %s100, %s102
      %p106 = scmp.eq.s32.totalorder %s19, 0
      %p107 = por %p105, %p106
      %p108 = scmp.ne.s32.totalorder %s100, %s102
      %p109 = scmp.eq.s32.totalorder %s24, 1
      %p110 = por %p108, %p109
      %p111 = scmp.ne.s32.totalorder %s102, %s103
      %p112 = scmp.eq.s32.totalorder %s24, 0
      %p113 = por %p111, %p112
      %p114 = scmp.ne.s32.totalorder %s102, %s103
      %p115 = scmp.eq.s32.totalorder %s25, 1
      %p116 = por %p114, %p115
      %p118 = scmp.ne.s32.totalorder %s103, %s117
      %p119 = scmp.eq.s32.totalorder %s25, 0
      %p120 = por %p118, %p119
      %s121 = ssub.s32 %s19, %s26
      %p122 = scmp.eq.s32.totalorder %s121, 0
      %s124 = sadd.s32 %s123, 1
      %s125 = scalar_select %p122, %s123, %s124
      %p128 = pneg %p122
      %p129 = scmp.eq.s32.totalorder %s19, 1
      %p130 = por %p128, %p129
      %p131 = scmp.ne.s32.totalorder %s123, %s126
      %p132 = scmp.eq.s32.totalorder %s19, 0
      %p133 = por %p131, %p132
      %p134 = scmp.ne.s32.totalorder %s123, %s126
      %p135 = scmp.eq.s32.totalorder %s24, 1
      %p136 = por %p134, %p135
      %p137 = scmp.ne.s32.totalorder %s126, %s127
      %p138 = scmp.eq.s32.totalorder %s24, 0
      %p139 = por %p137, %p138
      %p140 = scmp.ne.s32.totalorder %s126, %s127
      %p141 = scmp.eq.s32.totalorder %s25, 1
      %p142 = por %p140, %p141
      %p144 = scmp.ne.s32.totalorder %s127, %s143
      %p145 = scmp.eq.s32.totalorder %s25, 0
      %p146 = por %p144, %p145
      %p147 = scmp.le.s32.totalorder 1, %s19
      %p148 = scmp.lt.s32.totalorder %s19, 3
      %p149 = pnand %p147, %p148
      %p150 = pneg %p149
      // Predicated region
      $region9: #{tpu_custom_call.1} parent=5 // pred_check
        _
      $region10: #{tpu_custom_call.1} parent=5 // pred_check_branch
        %152 = sbr.rel (%p149) target = $region12
      $region11: #{tpu_custom_call.1} parent=5 // pred_region
        %s153 = ssub.s32 %s19, 1
        // Predicated region
        $region13: #{tpu_custom_call.1} parent=11 // pred_check
          %p154 = pneg %p92
        $region14: #{tpu_custom_call.1} parent=11 // pred_check_branch
          %156 = sbr.rel (%p154) target = $region16
        $region15: #{tpu_custom_call.1} parent=11 // pred_region
          %s158 = ssub.s32 256, 256
          %159 = vsyncadd [#allocation6], %s158
          %s160 = sshll.u32 [#allocation7], 4
          %s161 = int_to_ptr.vmem [resolvable:$true] %s160
          %166 = dma.hbm_to_vmem [thread:$0]  %s2, 256, %s161, [#allocation6], 64, 64, 4
        $region16: #{tpu_custom_call.1} parent=11 // pred_fallthru
          _
        // Predicated region
        $region17: #{tpu_custom_call.1} parent=11 // pred_check
          %p167 = pneg %p113
        $region18: #{tpu_custom_call.1} parent=11 // pred_check_branch
          %169 = sbr.rel (%p167) target = $region20
        $region19: #{tpu_custom_call.1} parent=11 // pred_region
          _
        $region20: #{tpu_custom_call.1} parent=11 // pred_fallthru
          _
      $region12: #{tpu_custom_call.1} parent=5 // pred_fallthru
        _
      %p170 = scmp.lt.s32.totalorder %s19, 2
      // Predicated region
      $region21: #{tpu_custom_call.1} parent=5 // pred_check
        %p171 = pneg %p170
      $region22: #{tpu_custom_call.1} parent=5 // pred_check_branch
        %173 = sbr.rel (%p171) target = $region24
      $region23: #{tpu_custom_call.1} parent=5 // pred_region
        // Predicated region
        $region25: #{tpu_custom_call.1} parent=23 // pred_check
          %p174 = pneg %p39
        $region26: #{tpu_custom_call.1} parent=23 // pred_check_branch
          %176 = sbr.rel (%p174) target = $region28
        $region27: #{tpu_custom_call.1} parent=23 // pred_region
          %s177 = sand.u32 %s29, 1
          %s178 = scalar_lea.sflag [#allocation3], %s177
          %s179 = sand.u32 %s29, 1
          %s180 = smul.addr %s179, 8
          %s181 = scalar_lea.vmem [#allocation2], %s180
          %s183 = ssub.s32 128, 128
          %184 = vsyncadd %s178, %s183
          %s185 = smul.addr %s19, 128
          %s186 = scalar_lea.hbm %s0, %s185
          %s188 = sshll.u32 %s181, 4
          %s189 = int_to_ptr.vmem [resolvable:$true] %s188
          %191 = dma.hbm_to_vmem [thread:$0]  %s186, 128, %s189, %s178
        $region28: #{tpu_custom_call.1} parent=23 // pred_fallthru
          _
        // Predicated region
        $region29: #{tpu_custom_call.1} parent=23 // pred_check
          %p192 = pneg %p65
        $region30: #{tpu_custom_call.1} parent=23 // pred_check_branch
          %194 = sbr.rel (%p192) target = $region32
        $region31: #{tpu_custom_call.1} parent=23 // pred_region
          %s195 = sand.u32 %s19, 1
          %s196 = scalar_lea.sflag [#allocation6], %s195
          %s197 = sand.u32 %s55, 1
          %s198 = scalar_lea.vmem [#allocation5], %s197
          %s200 = ssub.s32 16, 16
          %201 = vsyncadd %s196, %s200
          %s202 = smul.addr %s19, 16
          %s203 = scalar_lea.hbm %s1, %s202
          %s205 = sshll.u32 %s198, 4
          %s206 = int_to_ptr.vmem [resolvable:$true] %s205
          %208 = dma.hbm_to_vmem [thread:$0]  %s203, 16, %s206, %s196
        $region32: #{tpu_custom_call.1} parent=23 // pred_fallthru
          _
      $region24: #{tpu_custom_call.1} parent=5 // pred_fallthru
        _
      %p209 = scmp.le.s32.totalorder 1, %s19
      %p210 = scmp.lt.s32.totalorder %s19, 3
      %p211 = pnand %p209, %p210
      %p212 = pneg %p211
      // Predicated region
      $region33: #{tpu_custom_call.1} parent=5 // pred_check
        _
      $region34: #{tpu_custom_call.1} parent=5 // pred_check_branch
        %214 = sbr.rel (%p211) target = $region36
      $region35: #{tpu_custom_call.1} parent=5 // pred_region
        %s215 = ssub.s32 %s19, 1
        %s216 = sand.u32 %s32, 1
        %s217 = scalar_lea.sflag [#allocation3], %s216
        %s218 = sand.u32 %s32, 1
        %s219 = smul.addr %s218, 8
        %s220 = scalar_lea.vmem [#allocation2], %s219
        // Predicated region
        $region37: #{tpu_custom_call.1} parent=35 // pred_check
          %p221 = pneg %p45
        $region38: #{tpu_custom_call.1} parent=35 // pred_check_branch
          %223 = sbr.rel (%p221) target = $region40
        $region39: #{tpu_custom_call.1} parent=35 // pred_region
          %224 = dma.done %s217, 128
        $region40: #{tpu_custom_call.1} parent=35 // pred_fallthru
          _
        %s225 = sand.u32 %s24, 1
        %s226 = scalar_lea.sflag [#allocation6], %s225
        %s227 = sand.u32 %s58, 1
        %s228 = scalar_lea.vmem [#allocation5], %s227
        // Predicated region
        $region41: #{tpu_custom_call.1} parent=35 // pred_check
          %p229 = pneg %p71
        $region42: #{tpu_custom_call.1} parent=35 // pred_check_branch
          %231 = sbr.rel (%p229) target = $region44
        $region43: #{tpu_custom_call.1} parent=35 // pred_region
          %232 = dma.done %s226, 16
        $region44: #{tpu_custom_call.1} parent=35 // pred_fallthru
          _
        // Predicated region
        $region45: #{tpu_custom_call.1} parent=35 // pred_check
          %p233 = pneg %p92
        $region46: #{tpu_custom_call.1} parent=35 // pred_check_branch
          %235 = sbr.rel (%p233) target = $region48
        $region47: #{tpu_custom_call.1} parent=35 // pred_region
          %236 = dma.done [#allocation6], 256
        $region48: #{tpu_custom_call.1} parent=35 // pred_fallthru
          _
        %s237 = sand.u32 %s32, 1
        %s238 = scalar_lea.sflag [#allocation3], %s237
        %s239 = sand.u32 %s32, 1
        %s240 = smul.addr %s239, 8
        %s241 = scalar_lea.vmem [#allocation2], %s240
        %p242 = pneg %p45
        %p243 = pneg %p42
        %s244 = sand.u32 %s24, 1
        %s245 = scalar_lea.sflag [#allocation6], %s244
        %s246 = sand.u32 %s58, 1
        %s247 = scalar_lea.vmem [#allocation5], %s246
        %p248 = pneg %p71
        %p249 = pneg %p68
        %p250 = pneg %p92
        %p251 = pneg %p89
        %p252 = pneg %p113
        %p253 = pneg %p110
        %p254 = pneg %p139
        %p255 = pneg %p136
        %s256 = sand.u32 %s126, 1
        %s257 = scalar_lea.sflag [#allocation4], %s256
        %s258 = sand.u32 %s126, 1
        %s259 = smul.addr %s258, 4
        %s260 = scalar_lea.vmem [#allocation8], %s259
        %v262 = vld [vmem:[%s220] sm:$0xff]
        %v263 = vld [vmem:[%s228] sm:$0x1]
        %v264 = vpack.c.bf16 %v262, %v262
        %v265 = vld [vmem:[#allocation7] sm:$0xf]
        %v266 = vld [vmem:[#allocation7 + $0x4] sm:$0xf]
        %v267 = vld [vmem:[#allocation7 + $0x8] sm:$0xf]
        %v268 = vld [vmem:[#allocation7 + $0xc] sm:$0xf]
        %v269 = vld [vmem:[%s3] sm:$0x1]
        %v271 = vlaneseq
        %v272 = vshrl.u32 %v271, 7
        %v273 = vsub.s32 0, %v272
        %v274 = vrot.slane %v269, %v273
        %v280 = vunpack.c.l.b16 %v265
        %v281 = vunpack.c.l.b16 %v266
        %v282 = vunpack.c.l.b16 %v267
        %v283 = vunpack.c.l.b16 %v268
        %v284 = vpack.c.b16 %v281, %v280
        %v285 = vpack.c.b16 %v283, %v282
        %vm288 = vcmask 261120
        %v290 = vsel %vm288, %v264, 0
        %292 = vmatprep.subr.bf16.mxu0 0
        %293 = vmatpush1.bf16.msra.mxu0 0
        %294 = vmatprep.subr.bf16.mxu0 0
        %295 = vmatpush1.bf16.msra.mxu0 0
        %296 = vmatprep.subr.bf16.mxu0 0
        %297 = vmatpush1.bf16.msra.mxu0 0
        %298 = vmatprep.subr.bf16.mxu0 0
        %299 = vmatpush1.bf16.msra.mxu0 0
        %300 = vmatprep.subr.bf16.mxu0 0
        %301 = vmatpush1.bf16.msra.mxu0 0
        %302 = vmatprep.subr.bf16.mxu0 0
        %303 = vmatpush1.bf16.msra.mxu0 0
        %304 = vmatprep.subr.bf16.mxu0 0
        %305 = vmatpush1.bf16.msra.mxu0 %v285
        %306 = vmatprep.subr.bf16.mxu0 0
        %307 = vmatpush1.bf16.msra.mxu0 %v284
        %308 = vmatprep.subr.bf16.mxu0 0
        %309 = vmatpush2.bf16.msra.mxu0 0
        %310 = vmatprep.subr.bf16.mxu0 0
        %311 = vmatpush2.bf16.msra.mxu0 0
        %312 = vmatprep.subr.bf16.mxu0 0
        %313 = vmatpush2.bf16.msra.mxu0 0
        %314 = vmatprep.subr.bf16.mxu0 0
        %315 = vmatpush2.bf16.msra.mxu0 0
        %316 = vmatprep.subr.bf16.mxu0 0
        %317 = vmatpush2.bf16.msra.mxu0 0
        %318 = vmatprep.subr.bf16.mxu0 0
        %319 = vmatpush2.bf16.msra.mxu0 0
        %320 = vmatprep.subr.bf16.mxu0 0
        %321 = vmatpush2.bf16.msra.mxu0 0
        %322 = vmatprep.subr.bf16.mxu0 0
        %323 = vmatpush2.bf16.msra.mxu0 0
        %324 = vmatprep.mubr.bf16.mxu0 0
        %325 = vmatmul.mubr.bf16.gmra.mxu0 %v290
        %v326 = vpop.f32.mrf.mxu0
        %v327 = vadd.f32 %v274, %v326
        %v328 = vpop.f32.mrf.mxu0
        %v329 = vpop.f32.mrf.mxu0
        %v330 = vpop.f32.mrf.mxu0
        %331 = vdwg.mxu0
        %v332 = vpack.c.bf16 %v327, %v327
        %v334 = vlaneseq
        %v335 = vshrl.u32 %v334, 7
        %v336 = vsub.s32 0, %v335
        %v337 = vrot.slane %v263, %v336
        %340 = vrot.lane.b32.xlu0 %v332, 96
        %v341 = vpop.permute.xlu0 %340
        %vm342 = vcmask 64512
        %v344 = vsel %vm342, %v332, 0
        %v347 = vsel %vm342, %v341, 0
        %349 = vmatprep.subr.bf16.mxu0 0
        %350 = vmatpush1.bf16.xpose.msra.mxu0 0
        %351 = vmatprep.subr.bf16.mxu0 0
        %352 = vmatpush1.bf16.xpose.msra.mxu0 0
        %353 = vmatprep.subr.bf16.mxu0 0
        %354 = vmatpush1.bf16.xpose.msra.mxu0 0
        %355 = vmatprep.subr.bf16.mxu0 0
        %356 = vmatpush1.bf16.xpose.msra.mxu0 0
        %357 = vmatprep.subr.bf16.mxu0 0
        %358 = vmatpush1.bf16.xpose.msra.mxu0 0
        %359 = vmatprep.subr.bf16.mxu0 0
        %360 = vmatpush1.bf16.xpose.msra.mxu0 0
        %361 = vmatprep.subr.bf16.mxu0 0
        %362 = vmatpush1.bf16.xpose.msra.mxu0 0
        %363 = vmatprep.subr.bf16.mxu0 0
        %364 = vmatpush1.bf16.xpose.msra.mxu0 %v347
        %365 = vmatprep.subr.bf16.mxu0 0
        %366 = vmatpush2.bf16.xpose.msra.mxu0 0
        %367 = vmatprep.subr.bf16.mxu0 0
        %368 = vmatpush2.bf16.xpose.msra.mxu0 0
        %369 = vmatprep.subr.bf16.mxu0 0
        %370 = vmatpush2.bf16.xpose.msra.mxu0 0
        %371 = vmatprep.subr.bf16.mxu0 0
        %372 = vmatpush2.bf16.xpose.msra.mxu0 0
        %373 = vmatprep.subr.bf16.mxu0 0
        %374 = vmatpush2.bf16.xpose.msra.mxu0 0
        %375 = vmatprep.subr.bf16.mxu0 0
        %376 = vmatpush2.bf16.xpose.msra.mxu0 0
        %377 = vmatprep.subr.bf16.mxu0 0
        %378 = vmatpush2.bf16.xpose.msra.mxu0 0
        %379 = vmatprep.subr.bf16.mxu0 0
        %380 = vmatpush2.bf16.xpose.msra.mxu0 0
        %381 = vmatprep.mubr.bf16.mxu0 0
        %382 = vmatmul.mubr.bf16.gmra.mxu0 %v344
        %v383 = vpop.f32.mrf.mxu0
        %v384 = vadd.f32 %v337, %v383
        %v385 = vpop.f32.mrf.mxu0
        %v386 = vpop.f32.mrf.mxu0
        %v387 = vpop.f32.mrf.mxu0
        %388 = vdwg.mxu0
        %v389 = vsel %vm342, %v384, -inf
        %390 = vmax.xlane.f32.xlu0 %v389
        %v391 = vpop.xlane.xlu0 %390
        %v392 = vsub.f32 %v384, %v391
        %v393 = vpack.c.bf16 %v392, %v392
        %v395 = vmul.bf16 %v393, 1069105081
        %v396 = vpow.bf16.pop %v395
        %v397 = vunpack.c.l.bf16 %v396
        %v398 = vsel %vm342, %v397, 0.0
        %399 = vadd.xlane.f32.xlu0 %v398
        %v400 = vpop.xlane.xlu0 %399
        %401 = vrot.lane.b32.xlu0 %v332, 64
        %v402 = vpop.permute.xlu0 %401
        %v404 = vsel %vm342, %v396, 0
        %vm406 = vcmask 1043456
        %v408 = vsel %vm406, %v402, 0
        %410 = vmatprep.subr.bf16.mxu0 0
        %411 = vmatpush1.bf16.msra.mxu0 0
        %412 = vmatprep.subr.bf16.mxu0 0
        %413 = vmatpush1.bf16.msra.mxu0 0
        %414 = vmatprep.subr.bf16.mxu0 0
        %415 = vmatpush1.bf16.msra.mxu0 0
        %416 = vmatprep.subr.bf16.mxu0 0
        %417 = vmatpush1.bf16.msra.mxu0 0
        %418 = vmatprep.subr.bf16.mxu0 0
        %419 = vmatpush1.bf16.msra.mxu0 0
        %420 = vmatprep.subr.bf16.mxu0 0
        %421 = vmatpush1.bf16.msra.mxu0 0
        %422 = vmatprep.subr.bf16.mxu0 0
        %423 = vmatpush1.bf16.msra.mxu0 0
        %424 = vmatprep.subr.bf16.mxu0 0
        %425 = vmatpush1.bf16.msra.mxu0 %v408
        %426 = vmatprep.subr.bf16.mxu0 0
        %427 = vmatpush2.bf16.msra.mxu0 0
        %428 = vmatprep.subr.bf16.mxu0 0
        %429 = vmatpush2.bf16.msra.mxu0 0
        %430 = vmatprep.subr.bf16.mxu0 0
        %431 = vmatpush2.bf16.msra.mxu0 0
        %432 = vmatprep.subr.bf16.mxu0 0
        %433 = vmatpush2.bf16.msra.mxu0 0
        %434 = vmatprep.subr.bf16.mxu0 0
        %435 = vmatpush2.bf16.msra.mxu0 0
        %436 = vmatprep.subr.bf16.mxu0 0
        %437 = vmatpush2.bf16.msra.mxu0 0
        %438 = vmatprep.subr.bf16.mxu0 0
        %439 = vmatpush2.bf16.msra.mxu0 0
        %440 = vmatprep.subr.bf16.mxu0 0
        %441 = vmatpush2.bf16.msra.mxu0 0
        %442 = vmatprep.mubr.bf16.mxu0 0
        %443 = vmatmul.mubr.bf16.gmra.mxu0 %v404
        %v444 = vpop.f32.mrf.mxu0
        %v445 = vadd.f32 0.0, %v444
        %v446 = vpop.f32.mrf.mxu0
        %v447 = vpop.f32.mrf.mxu0
        %v448 = vpop.f32.mrf.mxu0
        %449 = vdwg.mxu0
        %v450 = vrcp.pop %v400
        %v451 = vmul.f32 %v445, %v450
        %452 = vrot.lane.b32.xlu0 %v332, 120
        %v453 = vpop.permute.xlu0 %452
        %454 = vrot.lane.b32.xlu0 %v332, 88
        %v455 = vpop.permute.xlu0 %454
        %v457 = vsel %vm342, %v453, 0
        %v460 = vsel %vm342, %v455, 0
        %462 = vmatprep.subr.bf16.mxu0 0
        %463 = vmatpush1.bf16.xpose.msra.mxu0 0
        %464 = vmatprep.subr.bf16.mxu0 0
        %465 = vmatpush1.bf16.xpose.msra.mxu0 0
        %466 = vmatprep.subr.bf16.mxu0 0
        %467 = vmatpush1.bf16.xpose.msra.mxu0 0
        %468 = vmatprep.subr.bf16.mxu0 0
        %469 = vmatpush1.bf16.xpose.msra.mxu0 0
        %470 = vmatprep.subr.bf16.mxu0 0
        %471 = vmatpush1.bf16.xpose.msra.mxu0 0
        %472 = vmatprep.subr.bf16.mxu0 0
        %473 = vmatpush1.bf16.xpose.msra.mxu0 0
        %474 = vmatprep.subr.bf16.mxu0 0
        %475 = vmatpush1.bf16.xpose.msra.mxu0 0
        %476 = vmatprep.subr.bf16.mxu0 0
        %477 = vmatpush1.bf16.xpose.msra.mxu0 %v460
        %478 = vmatprep.subr.bf16.mxu0 0
        %479 = vmatpush2.bf16.xpose.msra.mxu0 0
        %480 = vmatprep.subr.bf16.mxu0 0
        %481 = vmatpush2.bf16.xpose.msra.mxu0 0
        %482 = vmatprep.subr.bf16.mxu0 0
        %483 = vmatpush2.bf16.xpose.msra.mxu0 0
        %484 = vmatprep.subr.bf16.mxu0 0
        %485 = vmatpush2.bf16.xpose.msra.mxu0 0
        %486 = vmatprep.subr.bf16.mxu0 0
        %487 = vmatpush2.bf16.xpose.msra.mxu0 0
        %488 = vmatprep.subr.bf16.mxu0 0
        %489 = vmatpush2.bf16.xpose.msra.mxu0 0
        %490 = vmatprep.subr.bf16.mxu0 0
        %491 = vmatpush2.bf16.xpose.msra.mxu0 0
        %492 = vmatprep.subr.bf16.mxu0 0
        %493 = vmatpush2.bf16.xpose.msra.mxu0 0
        %494 = vmatprep.mubr.bf16.mxu0 0
        %495 = vmatmul.mubr.bf16.gmra.mxu0 %v457
        %v496 = vpop.f32.mrf.mxu0
        %v497 = vadd.f32 %v337, %v496
        %v498 = vpop.f32.mrf.mxu0
        %v499 = vpop.f32.mrf.mxu0
        %v500 = vpop.f32.mrf.mxu0
        %501 = vdwg.mxu0
        %v502 = vsel %vm342, %v497, -inf
        %503 = vmax.xlane.f32.xlu0 %v502
        %v504 = vpop.xlane.xlu0 %503
        %v505 = vsub.f32 %v497, %v504
        %v506 = vpack.c.bf16 %v505, %v505
        %v508 = vmul.bf16 %v506, 1069105081
        %v509 = vpow.bf16.pop %v508
        %v510 = vunpack.c.l.bf16 %v509
        %v511 = vsel %vm342, %v510, 0.0
        %512 = vadd.xlane.f32.xlu0 %v511
        %v513 = vpop.xlane.xlu0 %512
        %514 = vrot.lane.b32.xlu0 %v332, 56
        %v515 = vpop.permute.xlu0 %514
        %v517 = vsel %vm342, %v509, 0
        %v520 = vsel %vm406, %v515, 0
        %522 = vmatprep.subr.bf16.mxu0 0
        %523 = vmatpush1.bf16.msra.mxu0 0
        %524 = vmatprep.subr.bf16.mxu0 0
        %525 = vmatpush1.bf16.msra.mxu0 0
        %526 = vmatprep.subr.bf16.mxu0 0
        %527 = vmatpush1.bf16.msra.mxu0 0
        %528 = vmatprep.subr.bf16.mxu0 0
        %529 = vmatpush1.bf16.msra.mxu0 0
        %530 = vmatprep.subr.bf16.mxu0 0
        %531 = vmatpush1.bf16.msra.mxu0 0
        %532 = vmatprep.subr.bf16.mxu0 0
        %533 = vmatpush1.bf16.msra.mxu0 0
        %534 = vmatprep.subr.bf16.mxu0 0
        %535 = vmatpush1.bf16.msra.mxu0 0
        %536 = vmatprep.subr.bf16.mxu0 0
        %537 = vmatpush1.bf16.msra.mxu0 %v520
        %538 = vmatprep.subr.bf16.mxu0 0
        %539 = vmatpush2.bf16.msra.mxu0 0
        %540 = vmatprep.subr.bf16.mxu0 0
        %541 = vmatpush2.bf16.msra.mxu0 0
        %542 = vmatprep.subr.bf16.mxu0 0
        %543 = vmatpush2.bf16.msra.mxu0 0
        %544 = vmatprep.subr.bf16.mxu0 0
        %545 = vmatpush2.bf16.msra.mxu0 0
        %546 = vmatprep.subr.bf16.mxu0 0
        %547 = vmatpush2.bf16.msra.mxu0 0
        %548 = vmatprep.subr.bf16.mxu0 0
        %549 = vmatpush2.bf16.msra.mxu0 0
        %550 = vmatprep.subr.bf16.mxu0 0
        %551 = vmatpush2.bf16.msra.mxu0 0
        %552 = vmatprep.subr.bf16.mxu0 0
        %553 = vmatpush2.bf16.msra.mxu0 0
        %554 = vmatprep.mubr.bf16.mxu0 0
        %555 = vmatmul.mubr.bf16.gmra.mxu0 %v517
        %v556 = vpop.f32.mrf.mxu0
        %v557 = vadd.f32 0.0, %v556
        %v558 = vpop.f32.mrf.mxu0
        %v559 = vpop.f32.mrf.mxu0
        %v560 = vpop.f32.mrf.mxu0
        %561 = vdwg.mxu0
        %v562 = vrcp.pop %v513
        %v563 = vmul.f32 %v557, %v562
        %564 = vrot.lane.b32.xlu0 %v332, 112
        %v565 = vpop.permute.xlu0 %564
        %566 = vrot.lane.b32.xlu0 %v332, 80
        %v567 = vpop.permute.xlu0 %566
        %v569 = vsel %vm342, %v565, 0
        %v572 = vsel %vm342, %v567, 0
        %574 = vmatprep.subr.bf16.mxu0 0
        %575 = vmatpush1.bf16.xpose.msra.mxu0 0
        %576 = vmatprep.subr.bf16.mxu0 0
        %577 = vmatpush1.bf16.xpose.msra.mxu0 0
        %578 = vmatprep.subr.bf16.mxu0 0
        %579 = vmatpush1.bf16.xpose.msra.mxu0 0
        %580 = vmatprep.subr.bf16.mxu0 0
        %581 = vmatpush1.bf16.xpose.msra.mxu0 0
        %582 = vmatprep.subr.bf16.mxu0 0
        %583 = vmatpush1.bf16.xpose.msra.mxu0 0
        %584 = vmatprep.subr.bf16.mxu0 0
        %585 = vmatpush1.bf16.xpose.msra.mxu0 0
        %586 = vmatprep.subr.bf16.mxu0 0
        %587 = vmatpush1.bf16.xpose.msra.mxu0 0
        %588 = vmatprep.subr.bf16.mxu0 0
        %589 = vmatpush1.bf16.xpose.msra.mxu0 %v572
        %590 = vmatprep.subr.bf16.mxu0 0
        %591 = vmatpush2.bf16.xpose.msra.mxu0 0
        %592 = vmatprep.subr.bf16.mxu0 0
        %593 = vmatpush2.bf16.xpose.msra.mxu0 0
        %594 = vmatprep.subr.bf16.mxu0 0
        %595 = vmatpush2.bf16.xpose.msra.mxu0 0
        %596 = vmatprep.subr.bf16.mxu0 0
        %597 = vmatpush2.bf16.xpose.msra.mxu0 0
        %598 = vmatprep.subr.bf16.mxu0 0
        %599 = vmatpush2.bf16.xpose.msra.mxu0 0
        %600 = vmatprep.subr.bf16.mxu0 0
        %601 = vmatpush2.bf16.xpose.msra.mxu0 0
        %602 = vmatprep.subr.bf16.mxu0 0
        %603 = vmatpush2.bf16.xpose.msra.mxu0 0
        %604 = vmatprep.subr.bf16.mxu0 0
        %605 = vmatpush2.bf16.xpose.msra.mxu0 0
        %606 = vmatprep.mubr.bf16.mxu0 0
        %607 = vmatmul.mubr.bf16.gmra.mxu0 %v569
        %v608 = vpop.f32.mrf.mxu0
        %v609 = vadd.f32 %v337, %v608
        %v610 = vpop.f32.mrf.mxu0
        %v611 = vpop.f32.mrf.mxu0
        %v612 = vpop.f32.mrf.mxu0
        %613 = vdwg.mxu0
        %v614 = vsel %vm342, %v609, -inf
        %615 = vmax.xlane.f32.xlu0 %v614
        %v616 = vpop.xlane.xlu0 %615
        %v617 = vsub.f32 %v609, %v616
        %v618 = vpack.c.bf16 %v617, %v617
        %v620 = vmul.bf16 %v618, 1069105081
        %v621 = vpow.bf16.pop %v620
        %v622 = vunpack.c.l.bf16 %v621
        %v623 = vsel %vm342, %v622, 0.0
        %624 = vadd.xlane.f32.xlu0 %v623
        %v625 = vpop.xlane.xlu0 %624
        %626 = vrot.lane.b32.xlu0 %v332, 48
        %v627 = vpop.permute.xlu0 %626
        %v629 = vsel %vm342, %v621, 0
        %v632 = vsel %vm406, %v627, 0
        %634 = vmatprep.subr.bf16.mxu0 0
        %635 = vmatpush1.bf16.msra.mxu0 0
        %636 = vmatprep.subr.bf16.mxu0 0
        %637 = vmatpush1.bf16.msra.mxu0 0
        %638 = vmatprep.subr.bf16.mxu0 0
        %639 = vmatpush1.bf16.msra.mxu0 0
        %640 = vmatprep.subr.bf16.mxu0 0
        %641 = vmatpush1.bf16.msra.mxu0 0
        %642 = vmatprep.subr.bf16.mxu0 0
        %643 = vmatpush1.bf16.msra.mxu0 0
        %644 = vmatprep.subr.bf16.mxu0 0
        %645 = vmatpush1.bf16.msra.mxu0 0
        %646 = vmatprep.subr.bf16.mxu0 0
        %647 = vmatpush1.bf16.msra.mxu0 0
        %648 = vmatprep.subr.bf16.mxu0 0
        %649 = vmatpush1.bf16.msra.mxu0 %v632
        %650 = vmatprep.subr.bf16.mxu0 0
        %651 = vmatpush2.bf16.msra.mxu0 0
        %652 = vmatprep.subr.bf16.mxu0 0
        %653 = vmatpush2.bf16.msra.mxu0 0
        %654 = vmatprep.subr.bf16.mxu0 0
        %655 = vmatpush2.bf16.msra.mxu0 0
        %656 = vmatprep.subr.bf16.mxu0 0
        %657 = vmatpush2.bf16.msra.mxu0 0
        %658 = vmatprep.subr.bf16.mxu0 0
        %659 = vmatpush2.bf16.msra.mxu0 0
        %660 = vmatprep.subr.bf16.mxu0 0
        %661 = vmatpush2.bf16.msra.mxu0 0
        %662 = vmatprep.subr.bf16.mxu0 0
        %663 = vmatpush2.bf16.msra.mxu0 0
        %664 = vmatprep.subr.bf16.mxu0 0
        %665 = vmatpush2.bf16.msra.mxu0 0
        %666 = vmatprep.mubr.bf16.mxu0 0
        %667 = vmatmul.mubr.bf16.gmra.mxu0 %v629
        %v668 = vpop.f32.mrf.mxu0
        %v669 = vadd.f32 0.0, %v668
        %v670 = vpop.f32.mrf.mxu0
        %v671 = vpop.f32.mrf.mxu0
        %v672 = vpop.f32.mrf.mxu0
        %673 = vdwg.mxu0
        %v674 = vrcp.pop %v625
        %v675 = vmul.f32 %v669, %v674
        %676 = vrot.lane.b32.xlu0 %v332, 104
        %v677 = vpop.permute.xlu0 %676
        %678 = vrot.lane.b32.xlu0 %v332, 72
        %v679 = vpop.permute.xlu0 %678
        %v681 = vsel %vm342, %v677, 0
        %v684 = vsel %vm342, %v679, 0
        %686 = vmatprep.subr.bf16.mxu0 0
        %687 = vmatpush1.bf16.xpose.msra.mxu0 0
        %688 = vmatprep.subr.bf16.mxu0 0
        %689 = vmatpush1.bf16.xpose.msra.mxu0 0
        %690 = vmatprep.subr.bf16.mxu0 0
        %691 = vmatpush1.bf16.xpose.msra.mxu0 0
        %692 = vmatprep.subr.bf16.mxu0 0
        %693 = vmatpush1.bf16.xpose.msra.mxu0 0
        %694 = vmatprep.subr.bf16.mxu0 0
        %695 = vmatpush1.bf16.xpose.msra.mxu0 0
        %696 = vmatprep.subr.bf16.mxu0 0
        %697 = vmatpush1.bf16.xpose.msra.mxu0 0
        %698 = vmatprep.subr.bf16.mxu0 0
        %699 = vmatpush1.bf16.xpose.msra.mxu0 0
        %700 = vmatprep.subr.bf16.mxu0 0
        %701 = vmatpush1.bf16.xpose.msra.mxu0 %v684
        %702 = vmatprep.subr.bf16.mxu0 0
        %703 = vmatpush2.bf16.xpose.msra.mxu0 0
        %704 = vmatprep.subr.bf16.mxu0 0
        %705 = vmatpush2.bf16.xpose.msra.mxu0 0
        %706 = vmatprep.subr.bf16.mxu0 0
        %707 = vmatpush2.bf16.xpose.msra.mxu0 0
        %708 = vmatprep.subr.bf16.mxu0 0
        %709 = vmatpush2.bf16.xpose.msra.mxu0 0
        %710 = vmatprep.subr.bf16.mxu0 0
        %711 = vmatpush2.bf16.xpose.msra.mxu0 0
        %712 = vmatprep.subr.bf16.mxu0 0
        %713 = vmatpush2.bf16.xpose.msra.mxu0 0
        %714 = vmatprep.subr.bf16.mxu0 0
        %715 = vmatpush2.bf16.xpose.msra.mxu0 0
        %716 = vmatprep.subr.bf16.mxu0 0
        %717 = vmatpush2.bf16.xpose.msra.mxu0 0
        %718 = vmatprep.mubr.bf16.mxu0 0
        %719 = vmatmul.mubr.bf16.gmra.mxu0 %v681
        %v720 = vpop.f32.mrf.mxu0
        %v721 = vadd.f32 %v337, %v720
        %v722 = vpop.f32.mrf.mxu0
        %v723 = vpop.f32.mrf.mxu0
        %v724 = vpop.f32.mrf.mxu0
        %725 = vdwg.mxu0
        %v726 = vsel %vm342, %v721, -inf
        %727 = vmax.xlane.f32.xlu0 %v726
        %v728 = vpop.xlane.xlu0 %727
        %v729 = vsub.f32 %v721, %v728
        %v730 = vpack.c.bf16 %v729, %v729
        %v732 = vmul.bf16 %v730, 1069105081
        %v733 = vpow.bf16.pop %v732
        %v734 = vunpack.c.l.bf16 %v733
        %v735 = vsel %vm342, %v734, 0.0
        %736 = vadd.xlane.f32.xlu0 %v735
        %v737 = vpop.xlane.xlu0 %736
        %738 = vrot.lane.b32.xlu0 %v332, 40
        %v739 = vpop.permute.xlu0 %738
        %v741 = vsel %vm342, %v733, 0
        %v744 = vsel %vm406, %v739, 0
        %746 = vmatprep.subr.bf16.mxu0 0
        %747 = vmatpush1.bf16.msra.mxu0 0
        %748 = vmatprep.subr.bf16.mxu0 0
        %749 = vmatpush1.bf16.msra.mxu0 0
        %750 = vmatprep.subr.bf16.mxu0 0
        %751 = vmatpush1.bf16.msra.mxu0 0
        %752 = vmatprep.subr.bf16.mxu0 0
        %753 = vmatpush1.bf16.msra.mxu0 0
        %754 = vmatprep.subr.bf16.mxu0 0
        %755 = vmatpush1.bf16.msra.mxu0 0
        %756 = vmatprep.subr.bf16.mxu0 0
        %757 = vmatpush1.bf16.msra.mxu0 0
        %758 = vmatprep.subr.bf16.mxu0 0
        %759 = vmatpush1.bf16.msra.mxu0 0
        %760 = vmatprep.subr.bf16.mxu0 0
        %761 = vmatpush1.bf16.msra.mxu0 %v744
        %762 = vmatprep.subr.bf16.mxu0 0
        %763 = vmatpush2.bf16.msra.mxu0 0
        %764 = vmatprep.subr.bf16.mxu0 0
        %765 = vmatpush2.bf16.msra.mxu0 0
        %766 = vmatprep.subr.bf16.mxu0 0
        %767 = vmatpush2.bf16.msra.mxu0 0
        %768 = vmatprep.subr.bf16.mxu0 0
        %769 = vmatpush2.bf16.msra.mxu0 0
        %770 = vmatprep.subr.bf16.mxu0 0
        %771 = vmatpush2.bf16.msra.mxu0 0
        %772 = vmatprep.subr.bf16.mxu0 0
        %773 = vmatpush2.bf16.msra.mxu0 0
        %774 = vmatprep.subr.bf16.mxu0 0
        %775 = vmatpush2.bf16.msra.mxu0 0
        %776 = vmatprep.subr.bf16.mxu0 0
        %777 = vmatpush2.bf16.msra.mxu0 0
        %778 = vmatprep.mubr.bf16.mxu0 0
        %779 = vmatmul.mubr.bf16.gmra.mxu0 %v741
        %v780 = vpop.f32.mrf.mxu0
        %v781 = vadd.f32 0.0, %v780
        %v782 = vpop.f32.mrf.mxu0
        %v783 = vpop.f32.mrf.mxu0
        %v784 = vpop.f32.mrf.mxu0
        %785 = vdwg.mxu0
        %v786 = vrcp.pop %v737
        %v787 = vmul.f32 %v781, %v786
        %789 = vrot.lane.b32.xlu0 %v563, 8
        %v790 = vpop.permute.xlu0 %789
        %793 = vrot.lane.b32.xlu0 %v675, 16
        %v794 = vpop.permute.xlu0 %793
        %797 = vrot.lane.b32.xlu0 %v787, 24
        %v798 = vpop.permute.xlu0 %797
        %v800 = vsel %vm342, %v451, %v790
        %vm801 = vcmask 130048
        %v802 = vsel %vm801, %v800, %v794
        %vm803 = vcmask 195584
        %v804 = vsel %vm803, %v802, %v798
        %v805 = vpack.c.bf16 %v804, %v804
        %vm806 = vcmask 257024
        %807 = vst.msk [vmem:[%s260] sm:$0xf] %vm806, %v805
        %s808 = sand.u32 %s126, 1
        %s809 = scalar_lea.sflag [#allocation4], %s808
        %s810 = sand.u32 %s126, 1
        %s811 = smul.addr %s810, 4
        %s812 = scalar_lea.vmem [#allocation8], %s811
        // Predicated region
        $region49: #{tpu_custom_call.1} parent=35 // pred_check
          %p813 = pneg %p136
        $region50: #{tpu_custom_call.1} parent=35 // pred_check_branch
          %815 = sbr.rel (%p813) target = $region52
        $region51: #{tpu_custom_call.1} parent=35 // pred_region
          %s817 = ssub.s32 64, 64
          %818 = vsyncadd %s809, %s817
          %s819 = smul.addr %s24, 64
          %s820 = scalar_lea.hbm %s4, %s819
          %s822 = sshll.u32 %s812, 4
          %s823 = int_to_ptr.vmem [resolvable:$true] %s822
          %825 = dma.vmem_to_hbm [thread:$0]  %s823, 64, %s820, %s809
        $region52: #{tpu_custom_call.1} parent=35 // pred_fallthru
          _
      $region36: #{tpu_custom_call.1} parent=5 // pred_fallthru
        _
      %p826 = scmp.le.s32.totalorder 2, %s19
      // Predicated region
      $region53: #{tpu_custom_call.1} parent=5 // pred_check
        %p827 = pneg %p826
      $region54: #{tpu_custom_call.1} parent=5 // pred_check_branch
        %829 = sbr.rel (%p827) target = $region56
      $region55: #{tpu_custom_call.1} parent=5 // pred_region
        %s830 = ssub.s32 %s19, 2
        // Predicated region
        $region57: #{tpu_custom_call.1} parent=55 // pred_check
          %p831 = pneg %p142
        $region58: #{tpu_custom_call.1} parent=55 // pred_check_branch
          %833 = sbr.rel (%p831) target = $region60
        $region59: #{tpu_custom_call.1} parent=55 // pred_region
          %s834 = sand.u32 %s127, 1
          %s835 = scalar_lea.sflag [#allocation4], %s834
          %s836 = sand.u32 %s127, 1
          %s837 = smul.addr %s836, 4
          %s838 = scalar_lea.vmem [#allocation8], %s837
          %839 = dma.done %s835, 64
        $region60: #{tpu_custom_call.1} parent=55 // pred_fallthru
          _
      $region56: #{tpu_custom_call.1} parent=5 // pred_fallthru
        _
    $region6: #{tpu_custom_call.1} parent=1 // loop_footer
      %s23 = sadd.s32 1, %s19
    $region7: #{tpu_custom_call.1} parent=1 // loop_footer_branch
      %18 = sbr.rel target = $region3
    $region8: #{tpu_custom_call.1} parent=1 // loop_exit
      _
    %840 = vsyncpa [#allocation3], 1
    %s841 = scalar_lea.sflag [#allocation3], 1
    %842 = vsyncpa %s841, 1
    %843 = vsyncpa [#allocation6], 1
    %s844 = scalar_lea.sflag [#allocation6], 1
    %845 = vsyncpa %s844, 1
    %846 = vsyncpa [#allocation4], 1
    %s847 = scalar_lea.sflag [#allocation4], 1
    %848 = vsyncpa %s847, 1

// kernel: tpu_custom_call.1
$region0: #{tpu_custom_call.1}
  #allocation0 [shape = 'u32[]', space=smem, size = 0x4, offset = 0x4, fixed_abs, tag = 'smem constant byte address 0x4 - core index']
  #allocation1 [shape = 'u32[144,128]{1,0:T(1,128)}', space=vmem, size = 0x12000, scoped, tag = 'internal scratch']
  %s0 = inlined_call_operand.hbm [shape: f32[2,8,32], index: 0, kind: input, shape index: {}]
  %s1 = inlined_call_operand.hbm [shape: f32[2,1,8], index: 1, kind: input, shape index: {}]
  %s2 = inlined_call_operand.hbm [shape: bf16[32,96], index: 2, kind: input, shape index: {}]
  %s3 = inlined_call_operand.vmem [shape: f32[1,96], index: 3, kind: input, shape index: {}]
  %s4 = inlined_call_operand.hbm [shape: bf16[2,8,32], index: 4, kind: output, shape index: {}]
  %s5 = sld [smem:[#allocation0]]
  $region61: #{tpu_custom_call.1} parent=0
    _
  %s7 = ssub.s32 1, %s5
  %s8 = scalar_select 0, %s7, %s5
  $region1: #{tpu_custom_call.1} parent=0
    #allocation2 [shape = 'u8[8192]{0}', space=vmem, size = 0x2000, scoped, tag = 'input window, operand 0']
    #allocation3 [shape = 's32[2]{0}', space=sflag, size = 0x8, scoped, tag = 'scoped memory for tpu_custom_call.1']
    #allocation4 [shape = 's32[2]{0}', space=sflag, size = 0x8, scoped, tag = 'scoped memory for tpu_custom_call.1']
    #allocation5 [shape = 'u8[1024]{0}', space=vmem, size = 0x400, scoped, tag = 'input window, operand 1']
    #allocation6 [shape = 's32[2]{0}', space=sflag, size = 0x8, scoped, tag = 'scoped memory for tpu_custom_call.1']
    #allocation7 [shape = 'u8[8192]{0}', space=vmem, size = 0x2000, scoped, tag = 'input window, operand 2, single buffered']
    #allocation8 [shape = 'u8[4096]{0}', space=vmem, size = 0x1000, scoped, tag = 'output window, operand 0']
    %9 = vsyncpa [#allocation3], 0
    %s10 = scalar_lea.sflag [#allocation3], 1
    %11 = vsyncpa %s10, 0
    %12 = vsyncpa [#allocation6], 0
    %s13 = scalar_lea.sflag [#allocation6], 1
    %14 = vsyncpa %s13, 0
    %15 = vsyncpa [#allocation4], 0
    %s16 = scalar_lea.sflag [#allocation4], 1
    %17 = vsyncpa %s16, 0
    loop: start=0, step=1, limit=4
    $region2: #{tpu_custom_call.1} parent=1 // loop_pre_header
      _
    $region3: #{tpu_custom_call.1} parent=1 // loop_header
      %s19 = sphi 0, %s23
      %p20 = scmp.ge.s32.totalorder %s19, 4
      %s29 = sphi 0, %s31
      %s32 = sphi 0, %s29
      %s33 = sphi 0, %s32
      %s49 = sphi 0, %s33
      %s55 = sphi 0, %s57
      %s58 = sphi 0, %s55
      %s59 = sphi 0, %s58
      %s75 = sphi 0, %s59
      %s79 = sphi 0, %s79
      %s81 = sphi 0, %s79
      %s82 = sphi 0, %s81
      %s96 = sphi 0, %s82
      %s100 = sphi 0, %s100
      %s102 = sphi 0, %s100
      %s103 = sphi 0, %s102
      %s117 = sphi 0, %s103
      %s123 = sphi 0, %s125
      %s126 = sphi 0, %s123
      %s127 = sphi 0, %s126
      %s143 = sphi 0, %s127
    $region4: #{tpu_custom_call.1} parent=1 // loop_header_branch
      %22 = sbr.rel (%p20) target = $region8
    $region5: #{tpu_custom_call.1} parent=1 // loop_body
      %s24 = ssub.s32 %s19, 1
      %s25 = ssub.s32 %s19, 2
      %s26 = sadd.s32 %s19, 1
      %s27 = ssub.s32 %s19, %s26
      %p28 = scmp.eq.s32.totalorder %s27, 0
      %s30 = sadd.s32 %s29, 1
      %s31 = scalar_select %p28, %s29, %s30
      %p34 = pneg %p28
      %p35 = scmp.eq.s32.totalorder %s19, 1
      %p36 = por %p34, %p35
      %p37 = scmp.ne.s32.totalorder %s29, %s32
      %p38 = scmp.eq.s32.totalorder %s19, 0
      %p39 = por %p37, %p38
      %p40 = scmp.ne.s32.totalorder %s29, %s32
      %p41 = scmp.eq.s32.totalorder %s24, 1
      %p42 = por %p40, %p41
      %p43 = scmp.ne.s32.totalorder %s32, %s33
      %p44 = scmp.eq.s32.totalorder %s24, 0
      %p45 = por %p43, %p44
      %p46 = scmp.ne.s32.totalorder %s32, %s33
      %p47 = scmp.eq.s32.totalorder %s25, 1
      %p48 = por %p46, %p47
      %p50 = scmp.ne.s32.totalorder %s33, %s49
      %p51 = scmp.eq.s32.totalorder %s25, 0
      %p52 = por %p50, %p51
      %s53 = ssub.s32 %s19, %s26
      %p54 = scmp.eq.s32.totalorder %s53, 0
      %s56 = sadd.s32 %s55, 1
      %s57 = scalar_select %p54, %s55, %s56
      %p60 = pneg %p54
      %p61 = scmp.eq.s32.totalorder %s19, 1
      %p62 = por %p60, %p61
      %p63 = scmp.ne.s32.totalorder %s55, %s58
      %p64 = scmp.eq.s32.totalorder %s19, 0
      %p65 = por %p63, %p64
      %p66 = scmp.ne.s32.totalorder %s55, %s58
      %p67 = scmp.eq.s32.totalorder %s24, 1
      %p68 = por %p66, %p67
      %p69 = scmp.ne.s32.totalorder %s58, %s59
      %p70 = scmp.eq.s32.totalorder %s24, 0
      %p71 = por %p69, %p70
      %p72 = scmp.ne.s32.totalorder %s58, %s59
      %p73 = scmp.eq.s32.totalorder %s25, 1
      %p74 = por %p72, %p73
      %p76 = scmp.ne.s32.totalorder %s59, %s75
      %p77 = scmp.eq.s32.totalorder %s25, 0
      %p78 = por %p76, %p77
      %s80 = sadd.s32 %s79, 1
      %p83 = scmp.eq.s32.totalorder %s19, 1
      %p84 = scmp.ne.s32.totalorder %s79, %s81
      %p85 = scmp.eq.s32.totalorder %s19, 0
      %p86 = por %p84, %p85
      %p87 = scmp.ne.s32.totalorder %s79, %s81
      %p88 = scmp.eq.s32.totalorder %s24, 1
      %p89 = por %p87, %p88
      %p90 = scmp.ne.s32.totalorder %s81, %s82
      %p91 = scmp.eq.s32.totalorder %s24, 0
      %p92 = por %p90, %p91
      %p93 = scmp.ne.s32.totalorder %s81, %s82
      %p94 = scmp.eq.s32.totalorder %s25, 1
      %p95 = por %p93, %p94
      %p97 = scmp.ne.s32.totalorder %s82, %s96
      %p98 = scmp.eq.s32.totalorder %s25, 0
      %p99 = por %p97, %p98
      %s101 = sadd.s32 %s100, 1
      %p104 = scmp.eq.s32.totalorder %s19, 1
      %p105 = scmp.ne.s32.totalorder %s100, %s102
      %p106 = scmp.eq.s32.totalorder %s19, 0
      %p107 = por %p105, %p106
      %p108 = scmp.ne.s32.totalorder %s100, %s102
      %p109 = scmp.eq.s32.totalorder %s24, 1
      %p110 = por %p108, %p109
      %p111 = scmp.ne.s32.totalorder %s102, %s103
      %p112 = scmp.eq.s32.totalorder %s24, 0
      %p113 = por %p111, %p112
      %p114 = scmp.ne.s32.totalorder %s102, %s103
      %p115 = scmp.eq.s32.totalorder %s25, 1
      %p116 = por %p114, %p115
      %p118 = scmp.ne.s32.totalorder %s103, %s117
      %p119 = scmp.eq.s32.totalorder %s25, 0
      %p120 = por %p118, %p119
      %s121 = ssub.s32 %s19, %s26
      %p122 = scmp.eq.s32.totalorder %s121, 0
      %s124 = sadd.s32 %s123, 1
      %s125 = scalar_select %p122, %s123, %s124
      %p128 = pneg %p122
      %p129 = scmp.eq.s32.totalorder %s19, 1
      %p130 = por %p128, %p129
      %p131 = scmp.ne.s32.totalorder %s123, %s126
      %p132 = scmp.eq.s32.totalorder %s19, 0
      %p133 = por %p131, %p132
      %p134 = scmp.ne.s32.totalorder %s123, %s126
      %p135 = scmp.eq.s32.totalorder %s24, 1
      %p136 = por %p134, %p135
      %p137 = scmp.ne.s32.totalorder %s126, %s127
      %p138 = scmp.eq.s32.totalorder %s24, 0
      %p139 = por %p137, %p138
      %p140 = scmp.ne.s32.totalorder %s126, %s127
      %p141 = scmp.eq.s32.totalorder %s25, 1
      %p142 = por %p140, %p141
      %p144 = scmp.ne.s32.totalorder %s127, %s143
      %p145 = scmp.eq.s32.totalorder %s25, 0
      %p146 = por %p144, %p145
      %p147 = scmp.le.s32.totalorder 1, %s19
      %p148 = scmp.lt.s32.totalorder %s19, 3
      %p149 = pnand %p147, %p148
      %p150 = pneg %p149
      // Predicated region
      $region9: #{tpu_custom_call.1} parent=5 // pred_check
        _
      $region10: #{tpu_custom_call.1} parent=5 // pred_check_branch
        %152 = sbr.rel (%p149) target = $region12
      $region11: #{tpu_custom_call.1} parent=5 // pred_region
        %s153 = ssub.s32 %s19, 1
        // Predicated region
        $region13: #{tpu_custom_call.1} parent=11 // pred_check
          %p154 = pneg %p92
        $region14: #{tpu_custom_call.1} parent=11 // pred_check_branch
          %156 = sbr.rel (%p154) target = $region16
        $region15: #{tpu_custom_call.1} parent=11 // pred_region
          %s158 = ssub.s32 256, 256
          %159 = vsyncadd [#allocation6], %s158
          %s160 = sshll.u32 [#allocation7], 4
          %s161 = int_to_ptr.vmem [resolvable:$true] %s160
          %166 = dma.hbm_to_vmem [thread:$0]  %s2, 256, %s161, [#allocation6], 64, 64, 4
        $region16: #{tpu_custom_call.1} parent=11 // pred_fallthru
          _
        // Predicated region
        $region17: #{tpu_custom_call.1} parent=11 // pred_check
          %p167 = pneg %p113
        $region18: #{tpu_custom_call.1} parent=11 // pred_check_branch
          %169 = sbr.rel (%p167) target = $region20
        $region19: #{tpu_custom_call.1} parent=11 // pred_region
          _
        $region20: #{tpu_custom_call.1} parent=11 // pred_fallthru
          _
      $region12: #{tpu_custom_call.1} parent=5 // pred_fallthru
        _
      %p170 = scmp.lt.s32.totalorder %s19, 2
      // Predicated region
      $region21: #{tpu_custom_call.1} parent=5 // pred_check
        %p171 = pneg %p170
      $region22: #{tpu_custom_call.1} parent=5 // pred_check_branch
        %173 = sbr.rel (%p171) target = $region24
      $region23: #{tpu_custom_call.1} parent=5 // pred_region
        // Predicated region
        $region25: #{tpu_custom_call.1} parent=23 // pred_check
          %p174 = pneg %p39
        $region26: #{tpu_custom_call.1} parent=23 // pred_check_branch
          %176 = sbr.rel (%p174) target = $region28
        $region27: #{tpu_custom_call.1} parent=23 // pred_region
          %s177 = sand.u32 %s29, 1
          %s178 = scalar_lea.sflag [#allocation3], %s177
          %s179 = sand.u32 %s29, 1
          %s180 = smul.addr %s179, 8
          %s181 = scalar_lea.vmem [#allocation2], %s180
          %s183 = ssub.s32 128, 128
          %184 = vsyncadd %s178, %s183
          %s185 = smul.addr %s19, 128
          %s186 = scalar_lea.hbm %s0, %s185
          %s188 = sshll.u32 %s181, 4
          %s189 = int_to_ptr.vmem [resolvable:$true] %s188
          %191 = dma.hbm_to_vmem [thread:$0]  %s186, 128, %s189, %s178
        $region28: #{tpu_custom_call.1} parent=23 // pred_fallthru
          _
        // Predicated region
        $region29: #{tpu_custom_call.1} parent=23 // pred_check
          %p192 = pneg %p65
        $region30: #{tpu_custom_call.1} parent=23 // pred_check_branch
          %194 = sbr.rel (%p192) target = $region32
        $region31: #{tpu_custom_call.1} parent=23 // pred_region
          %s195 = sand.u32 %s19, 1
          %s196 = scalar_lea.sflag [#allocation6], %s195
          %s197 = sand.u32 %s55, 1
          %s198 = scalar_lea.vmem [#allocation5], %s197
          %s200 = ssub.s32 16, 16
          %201 = vsyncadd %s196, %s200
          %s202 = smul.addr %s19, 16
          %s203 = scalar_lea.hbm %s1, %s202
          %s205 = sshll.u32 %s198, 4
          %s206 = int_to_ptr.vmem [resolvable:$true] %s205
          %208 = dma.hbm_to_vmem [thread:$0]  %s203, 16, %s206, %s196
        $region32: #{tpu_custom_call.1} parent=23 // pred_fallthru
          _
      $region24: #{tpu_custom_call.1} parent=5 // pred_fallthru
        _
      %p209 = scmp.le.s32.totalorder 1, %s19
      %p210 = scmp.lt.s32.totalorder %s19, 3
      %p211 = pnand %p209, %p210
      %p212 = pneg %p211
      // Predicated region
      $region33: #{tpu_custom_call.1} parent=5 // pred_check
        _
      $region34: #{tpu_custom_call.1} parent=5 // pred_check_branch
        %214 = sbr.rel (%p211) target = $region36
      $region35: #{tpu_custom_call.1} parent=5 // pred_region
        %s215 = ssub.s32 %s19, 1
        %s216 = sand.u32 %s32, 1
        %s217 = scalar_lea.sflag [#allocation3], %s216
        %s218 = sand.u32 %s32, 1
        %s219 = smul.addr %s218, 8
        %s220 = scalar_lea.vmem [#allocation2], %s219
        // Predicated region
        $region37: #{tpu_custom_call.1} parent=35 // pred_check
          %p221 = pneg %p45
        $region38: #{tpu_custom_call.1} parent=35 // pred_check_branch
          %223 = sbr.rel (%p221) target = $region40
        $region39: #{tpu_custom_call.1} parent=35 // pred_region
          %224 = dma.done %s217, 128
        $region40: #{tpu_custom_call.1} parent=35 // pred_fallthru
          _
        %s225 = sand.u32 %s24, 1
        %s226 = scalar_lea.sflag [#allocation6], %s225
        %s227 = sand.u32 %s58, 1
        %s228 = scalar_lea.vmem [#allocation5], %s227
        // Predicated region
        $region41: #{tpu_custom_call.1} parent=35 // pred_check
          %p229 = pneg %p71
        $region42: #{tpu_custom_call.1} parent=35 // pred_check_branch
          %231 = sbr.rel (%p229) target = $region44
        $region43: #{tpu_custom_call.1} parent=35 // pred_region
          %232 = dma.done %s226, 16
        $region44: #{tpu_custom_call.1} parent=35 // pred_fallthru
          _
        // Predicated region
        $region45: #{tpu_custom_call.1} parent=35 // pred_check
          %p233 = pneg %p92
        $region46: #{tpu_custom_call.1} parent=35 // pred_check_branch
          %235 = sbr.rel (%p233) target = $region48
        $region47: #{tpu_custom_call.1} parent=35 // pred_region
          %236 = dma.done [#allocation6], 256
        $region48: #{tpu_custom_call.1} parent=35 // pred_fallthru
          _
        %s237 = sand.u32 %s32, 1
        %s238 = scalar_lea.sflag [#allocation3], %s237
        %s239 = sand.u32 %s32, 1
        %s240 = smul.addr %s239, 8
        %s241 = scalar_lea.vmem [#allocation2], %s240
        %p242 = pneg %p45
        %p243 = pneg %p42
        %s244 = sand.u32 %s24, 1
        %s245 = scalar_lea.sflag [#allocation6], %s244
        %s246 = sand.u32 %s58, 1
        %s247 = scalar_lea.vmem [#allocation5], %s246
        %p248 = pneg %p71
        %p249 = pneg %p68
        %p250 = pneg %p92
        %p251 = pneg %p89
        %p252 = pneg %p113
        %p253 = pneg %p110
        %p254 = pneg %p139
        %p255 = pneg %p136
        %s256 = sand.u32 %s126, 1
        %s257 = scalar_lea.sflag [#allocation4], %s256
        %s258 = sand.u32 %s126, 1
        %s259 = smul.addr %s258, 4
        %s260 = scalar_lea.vmem [#allocation8], %s259
        %v262 = vld [vmem:[%s220] sm:$0xff]
        %v263 = vld [vmem:[%s228] sm:$0x1]
        %v264 = vpack.c.bf16 %v262, %v262
        %v265 = vld [vmem:[#allocation7] sm:$0xf]
        %v266 = vld [vmem:[#allocation7 + $0x4] sm:$0xf]
        %v267 = vld [vmem:[#allocation7 + $0x8] sm:$0xf]
        %v268 = vld [vmem:[#allocation7 + $0xc] sm:$0xf]
        %v269 = vld [vmem:[%s3] sm:$0x1]
        %v271 = vlaneseq
        %v272 = vshrl.u32 %v271, 7
        %v273 = vsub.s32 0, %v272
        %v274 = vrot.slane %v269, %v273
        %v280 = vunpack.c.l.b16 %v265
        %v281 = vunpack.c.l.b16 %v266
        %v282 = vunpack.c.l.b16 %v267
        %v283 = vunpack.c.l.b16 %v268
        %v284 = vpack.c.b16 %v281, %v280
        %v285 = vpack.c.b16 %v283, %v282
        %vm288 = vcmask 261120
        %v290 = vsel %vm288, %v264, 0
        %292 = vmatprep.subr.bf16.mxu0 0
        %293 = vmatpush1.bf16.msra.mxu0 0
        %294 = vmatprep.subr.bf16.mxu0 0
        %295 = vmatpush1.bf16.msra.mxu0 0
        %296 = vmatprep.subr.bf16.mxu0 0
        %297 = vmatpush1.bf16.msra.mxu0 0
        %298 = vmatprep.subr.bf16.mxu0 0
        %299 = vmatpush1.bf16.msra.mxu0 0
        %300 = vmatprep.subr.bf16.mxu0 0
        %301 = vmatpush1.bf16.msra.mxu0 0
        %302 = vmatprep.subr.bf16.mxu0 0
        %303 = vmatpush1.bf16.msra.mxu0 0
        %304 = vmatprep.subr.bf16.mxu0 0
        %305 = vmatpush1.bf16.msra.mxu0 %v285
        %306 = vmatprep.subr.bf16.mxu0 0
        %307 = vmatpush1.bf16.msra.mxu0 %v284
        %308 = vmatprep.subr.bf16.mxu0 0
        %309 = vmatpush2.bf16.msra.mxu0 0
        %310 = vmatprep.subr.bf16.mxu0 0
        %311 = vmatpush2.bf16.msra.mxu0 0
        %312 = vmatprep.subr.bf16.mxu0 0
        %313 = vmatpush2.bf16.msra.mxu0 0
        %314 = vmatprep.subr.bf16.mxu0 0
        %315 = vmatpush2.bf16.msra.mxu0 0
        %316 = vmatprep.subr.bf16.mxu0 0
        %317 = vmatpush2.bf16.msra.mxu0 0
        %318 = vmatprep.subr.bf16.mxu0 0
        %319 = vmatpush2.bf16.msra.mxu0 0
        %320 = vmatprep.subr.bf16.mxu0 0
        %321 = vmatpush2.bf16.msra.mxu0 0
        %322 = vmatprep.subr.bf16.mxu0 0
        %323 = vmatpush2.bf16.msra.mxu0 0
        %324 = vmatprep.mubr.bf16.mxu0 0
        %325 = vmatmul.mubr.bf16.gmra.mxu0 %v290
        %v326 = vpop.f32.mrf.mxu0
        %v327 = vadd.f32 %v274, %v326
        %v328 = vpop.f32.mrf.mxu0
        %v329 = vpop.f32.mrf.mxu0
        %v330 = vpop.f32.mrf.mxu0
        %331 = vdwg.mxu0
        %v332 = vpack.c.bf16 %v327, %v327
        %v334 = vlaneseq
        %v335 = vshrl.u32 %v334, 7
        %v336 = vsub.s32 0, %v335
        %v337 = vrot.slane %v263, %v336
        %340 = vrot.lane.b32.xlu0 %v332, 96
        %v341 = vpop.permute.xlu0 %340
        %vm342 = vcmask 64512
        %v344 = vsel %vm342, %v332, 0
        %v347 = vsel %vm342, %v341, 0
        %349 = vmatprep.subr.bf16.mxu0 0
        %350 = vmatpush1.bf16.xpose.msra.mxu0 0
        %351 = vmatprep.subr.bf16.mxu0 0
        %352 = vmatpush1.bf16.xpose.msra.mxu0 0
        %353 = vmatprep.subr.bf16.mxu0 0
        %354 = vmatpush1.bf16.xpose.msra.mxu0 0
        %355 = vmatprep.subr.bf16.mxu0 0
        %356 = vmatpush1.bf16.xpose.msra.mxu0 0
        %357 = vmatprep.subr.bf16.mxu0 0
        %358 = vmatpush1.bf16.xpose.msra.mxu0 0
        %359 = vmatprep.subr.bf16.mxu0 0
        %360 = vmatpush1.bf16.xpose.msra.mxu0 0
        %361 = vmatprep.subr.bf16.mxu0 0
        %362 = vmatpush1.bf16.xpose.msra.mxu0 0
        %363 = vmatprep.subr.bf16.mxu0 0
        %364 = vmatpush1.bf16.xpose.msra.mxu0 %v347
        %365 = vmatprep.subr.bf16.mxu0 0
        %366 = vmatpush2.bf16.xpose.msra.mxu0 0
        %367 = vmatprep.subr.bf16.mxu0 0
        %368 = vmatpush2.bf16.xpose.msra.mxu0 0
        %369 = vmatprep.subr.bf16.mxu0 0
        %370 = vmatpush2.bf16.xpose.msra.mxu0 0
        %371 = vmatprep.subr.bf16.mxu0 0
        %372 = vmatpush2.bf16.xpose.msra.mxu0 0
        %373 = vmatprep.subr.bf16.mxu0 0
        %374 = vmatpush2.bf16.xpose.msra.mxu0 0
        %375 = vmatprep.subr.bf16.mxu0 0
        %376 = vmatpush2.bf16.xpose.msra.mxu0 0
        %377 = vmatprep.subr.bf16.mxu0 0
        %378 = vmatpush2.bf16.xpose.msra.mxu0 0
        %379 = vmatprep.subr.bf16.mxu0 0
        %380 = vmatpush2.bf16.xpose.msra.mxu0 0
        %381 = vmatprep.mubr.bf16.mxu0 0
        %382 = vmatmul.mubr.bf16.gmra.mxu0 %v344
        %v383 = vpop.f32.mrf.mxu0
        %v384 = vadd.f32 %v337, %v383
        %v385 = vpop.f32.mrf.mxu0
        %v386 = vpop.f32.mrf.mxu0
        %v387 = vpop.f32.mrf.mxu0
        %388 = vdwg.mxu0
        %v389 = vsel %vm342, %v384, -inf
        %390 = vmax.xlane.f32.xlu0 %v389
        %v391 = vpop.xlane.xlu0 %390
        %v392 = vsub.f32 %v384, %v391
        %v393 = vpack.c.bf16 %v392, %v392
        %v395 = vmul.bf16 %v393, 1069105081
        %v396 = vpow.bf16.pop %v395
        %v397 = vunpack.c.l.bf16 %v396
        %v398 = vsel %vm342, %v397, 0.0
        %399 = vadd.xlane.f32.xlu0 %v398
        %v400 = vpop.xlane.xlu0 %399
        %401 = vrot.lane.b32.xlu0 %v332, 64
        %v402 = vpop.permute.xlu0 %401
        %v404 = vsel %vm342, %v396, 0
        %vm406 = vcmask 1043456
        %v408 = vsel %vm406, %v402, 0
        %410 = vmatprep.subr.bf16.mxu0 0
        %411 = vmatpush1.bf16.msra.mxu0 0
        %412 = vmatprep.subr.bf16.mxu0 0
        %413 = vmatpush1.bf16.msra.mxu0 0
        %414 = vmatprep.subr.bf16.mxu0 0
        %415 = vmatpush1.bf16.msra.mxu0 0
        %416 = vmatprep.subr.bf16.mxu0 0
        %417 = vmatpush1.bf16.msra.mxu0 0
        %418 = vmatprep.subr.bf16.mxu0 0
        %419 = vmatpush1.bf16.msra.mxu0 0
        %420 = vmatprep.subr.bf16.mxu0 0
        %421 = vmatpush1.bf16.msra.mxu0 0
        %422 = vmatprep.subr.bf16.mxu0 0
        %423 = vmatpush1.bf16.msra.mxu0 0
        %424 = vmatprep.subr.bf16.mxu0 0
        %425 = vmatpush1.bf16.msra.mxu0 %v408
        %426 = vmatprep.subr.bf16.mxu0 0
        %427 = vmatpush2.bf16.msra.mxu0 0
        %428 = vmatprep.subr.bf16.mxu0 0
        %429 = vmatpush2.bf16.msra.mxu0 0
        %430 = vmatprep.subr.bf16.mxu0 0
        %431 = vmatpush2.bf16.msra.mxu0 0
        %432 = vmatprep.subr.bf16.mxu0 0
        %433 = vmatpush2.bf16.msra.mxu0 0
        %434 = vmatprep.subr.bf16.mxu0 0
        %435 = vmatpush2.bf16.msra.mxu0 0
        %436 = vmatprep.subr.bf16.mxu0 0
        %437 = vmatpush2.bf16.msra.mxu0 0
        %438 = vmatprep.subr.bf16.mxu0 0
        %439 = vmatpush2.bf16.msra.mxu0 0
        %440 = vmatprep.subr.bf16.mxu0 0
        %441 = vmatpush2.bf16.msra.mxu0 0
        %442 = vmatprep.mubr.bf16.mxu0 0
        %443 = vmatmul.mubr.bf16.gmra.mxu0 %v404
        %v444 = vpop.f32.mrf.mxu0
        %v445 = vadd.f32 0.0, %v444
        %v446 = vpop.f32.mrf.mxu0
        %v447 = vpop.f32.mrf.mxu0
        %v448 = vpop.f32.mrf.mxu0
        %449 = vdwg.mxu0
        %v450 = vrcp.pop %v400
        %v451 = vmul.f32 %v445, %v450
        %452 = vrot.lane.b32.xlu0 %v332, 120
        %v453 = vpop.permute.xlu0 %452
        %454 = vrot.lane.b32.xlu0 %v332, 88
        %v455 = vpop.permute.xlu0 %454
        %v457 = vsel %vm342, %v453, 0
        %v460 = vsel %vm342, %v455, 0
        %462 = vmatprep.subr.bf16.mxu0 0
        %463 = vmatpush1.bf16.xpose.msra.mxu0 0
        %464 = vmatprep.subr.bf16.mxu0 0
        %465 = vmatpush1.bf16.xpose.msra.mxu0 0
        %466 = vmatprep.subr.bf16.mxu0 0
        %467 = vmatpush1.bf16.xpose.msra.mxu0 0
        %468 = vmatprep.subr.bf16.mxu0 0
        %469 = vmatpush1.bf16.xpose.msra.mxu0 0
        %470 = vmatprep.subr.bf16.mxu0 0
        %471 = vmatpush1.bf16.xpose.msra.mxu0 0
        %472 = vmatprep.subr.bf16.mxu0 0
        %473 = vmatpush1.bf16.xpose.msra.mxu0 0
        %474 = vmatprep.subr.bf16.mxu0 0
        %475 = vmatpush1.bf16.xpose.msra.mxu0 0
        %476 = vmatprep.subr.bf16.mxu0 0
        %477 = vmatpush1.bf16.xpose.msra.mxu0 %v460
        %478 = vmatprep.subr.bf16.mxu0 0
        %479 = vmatpush2.bf16.xpose.msra.mxu0 0
        %480 = vmatprep.subr.bf16.mxu0 0
        %481 = vmatpush2.bf16.xpose.msra.mxu0 0
        %482 = vmatprep.subr.bf16.mxu0 0
        %483 = vmatpush2.bf16.xpose.msra.mxu0 0
        %484 = vmatprep.subr.bf16.mxu0 0
        %485 = vmatpush2.bf16.xpose.msra.mxu0 0
        %486 = vmatprep.subr.bf16.mxu0 0
        %487 = vmatpush2.bf16.xpose.msra.mxu0 0
        %488 = vmatprep.subr.bf16.mxu0 0
        %489 = vmatpush2.bf16.xpose.msra.mxu0 0
        %490 = vmatprep.subr.bf16.mxu0 0
        %491 = vmatpush2.bf16.xpose.msra.mxu0 0
        %492 = vmatprep.subr.bf16.mxu0 0
        %493 = vmatpush2.bf16.xpose.msra.mxu0 0
        %494 = vmatprep.mubr.bf16.mxu0 0
        %495 = vmatmul.mubr.bf16.gmra.mxu0 %v457
        %v496 = vpop.f32.mrf.mxu0
        %v497 = vadd.f32 %v337, %v496
        %v498 = vpop.f32.mrf.mxu0
        %v499 = vpop.f32.mrf.mxu0
        %v500 = vpop.f32.mrf.mxu0
        %501 = vdwg.mxu0
        %v502 = vsel %vm342, %v497, -inf
        %503 = vmax.xlane.f32.xlu0 %v502
        %v504 = vpop.xlane.xlu0 %503
        %v505 = vsub.f32 %v497, %v504
        %v506 = vpack.c.bf16 %v505, %v505
        %v508 = vmul.bf16 %v506, 1069105081
        %v509 = vpow.bf16.pop %v508
        %v510 = vunpack.c.l.bf16 %v509
        %v511 = vsel %vm342, %v510, 0.0
        %512 = vadd.xlane.f32.xlu0 %v511
        %v513 = vpop.xlane.xlu0 %512
        %514 = vrot.lane.b32.xlu0 %v332, 56
        %v515 = vpop.permute.xlu0 %514
        %v517 = vsel %vm342, %v509, 0
        %v520 = vsel %vm406, %v515, 0
        %522 = vmatprep.subr.bf16.mxu0 0
        %523 = vmatpush1.bf16.msra.mxu0 0
        %524 = vmatprep.subr.bf16.mxu0 0
        %525 = vmatpush1.bf16.msra.mxu0 0
        %526 = vmatprep.subr.bf16.mxu0 0
        %527 = vmatpush1.bf16.msra.mxu0 0
        %528 = vmatprep.subr.bf16.mxu0 0
        %529 = vmatpush1.bf16.msra.mxu0 0
        %530 = vmatprep.subr.bf16.mxu0 0
        %531 = vmatpush1.bf16.msra.mxu0 0
        %532 = vmatprep.subr.bf16.mxu0 0
        %533 = vmatpush1.bf16.msra.mxu0 0
        %534 = vmatprep.subr.bf16.mxu0 0
        %535 = vmatpush1.bf16.msra.mxu0 0
        %536 = vmatprep.subr.bf16.mxu0 0
        %537 = vmatpush1.bf16.msra.mxu0 %v520
        %538 = vmatprep.subr.bf16.mxu0 0
        %539 = vmatpush2.bf16.msra.mxu0 0
        %540 = vmatprep.subr.bf16.mxu0 0
        %541 = vmatpush2.bf16.msra.mxu0 0
        %542 = vmatprep.subr.bf16.mxu0 0
        %543 = vmatpush2.bf16.msra.mxu0 0
        %544 = vmatprep.subr.bf16.mxu0 0
        %545 = vmatpush2.bf16.msra.mxu0 0
        %546 = vmatprep.subr.bf16.mxu0 0
        %547 = vmatpush2.bf16.msra.mxu0 0
        %548 = vmatprep.subr.bf16.mxu0 0
        %549 = vmatpush2.bf16.msra.mxu0 0
        %550 = vmatprep.subr.bf16.mxu0 0
        %551 = vmatpush2.bf16.msra.mxu0 0
        %552 = vmatprep.subr.bf16.mxu0 0
        %553 = vmatpush2.bf16.msra.mxu0 0
        %554 = vmatprep.mubr.bf16.mxu0 0
        %555 = vmatmul.mubr.bf16.gmra.mxu0 %v517
        %v556 = vpop.f32.mrf.mxu0
        %v557 = vadd.f32 0.0, %v556
        %v558 = vpop.f32.mrf.mxu0
        %v559 = vpop.f32.mrf.mxu0
        %v560 = vpop.f32.mrf.mxu0
        %561 = vdwg.mxu0
        %v562 = vrcp.pop %v513
        %v563 = vmul.f32 %v557, %v562
        %564 = vrot.lane.b32.xlu0 %v332, 112
        %v565 = vpop.permute.xlu0 %564
        %566 = vrot.lane.b32.xlu0 %v332, 80
        %v567 = vpop.permute.xlu0 %566
        %v569 = vsel %vm342, %v565, 0
        %v572 = vsel %vm342, %v567, 0
        %574 = vmatprep.subr.bf16.mxu0 0
        %575 = vmatpush1.bf16.xpose.msra.mxu0 0
        %576 = vmatprep.subr.bf16.mxu0 0
        %577 = vmatpush1.bf16.xpose.msra.mxu0 0
        %578 = vmatprep.subr.bf16.mxu0 0
        %579 = vmatpush1.bf16.xpose.msra.mxu0 0
        %580 = vmatprep.subr.bf16.mxu0 0
        %581 = vmatpush1.bf16.xpose.msra.mxu0 0
        %582 = vmatprep.subr.bf16.mxu0 0
        %583 = vmatpush1.bf16.xpose.msra.mxu0 0
        %584 = vmatprep.subr.bf16.mxu0 0
        %585 = vmatpush1.bf16.xpose.msra.mxu0 0
        %586 = vmatprep.subr.bf16.mxu0 0
        %587 = vmatpush1.bf16.xpose.msra.mxu0 0
        %588 = vmatprep.subr.bf16.mxu0 0
        %589 = vmatpush1.bf16.xpose.msra.mxu0 %v572
        %590 = vmatprep.subr.bf16.mxu0 0
        %591 = vmatpush2.bf16.xpose.msra.mxu0 0
        %592 = vmatprep.subr.bf16.mxu0 0
        %593 = vmatpush2.bf16.xpose.msra.mxu0 0
        %594 = vmatprep.subr.bf16.mxu0 0
        %595 = vmatpush2.bf16.xpose.msra.mxu0 0
        %596 = vmatprep.subr.bf16.mxu0 0
        %597 = vmatpush2.bf16.xpose.msra.mxu0 0
        %598 = vmatprep.subr.bf16.mxu0 0
        %599 = vmatpush2.bf16.xpose.msra.mxu0 0
        %600 = vmatprep.subr.bf16.mxu0 0
        %601 = vmatpush2.bf16.xpose.msra.mxu0 0
        %602 = vmatprep.subr.bf16.mxu0 0
        %603 = vmatpush2.bf16.xpose.msra.mxu0 0
        %604 = vmatprep.subr.bf16.mxu0 0
        %605 = vmatpush2.bf16.xpose.msra.mxu0 0
        %606 = vmatprep.mubr.bf16.mxu0 0
        %607 = vmatmul.mubr.bf16.gmra.mxu0 %v569
        %v608 = vpop.f32.mrf.mxu0
        %v609 = vadd.f32 %v337, %v608
        %v610 = vpop.f32.mrf.mxu0
        %v611 = vpop.f32.mrf.mxu0
        %v612 = vpop.f32.mrf.mxu0
        %613 = vdwg.mxu0
        %v614 = vsel %vm342, %v609, -inf
        %615 = vmax.xlane.f32.xlu0 %v614
        %v616 = vpop.xlane.xlu0 %615
        %v617 = vsub.f32 %v609, %v616
        %v618 = vpack.c.bf16 %v617, %v617
        %v620 = vmul.bf16 %v618, 1069105081
        %v621 = vpow.bf16.pop %v620
        %v622 = vunpack.c.l.bf16 %v621
        %v623 = vsel %vm342, %v622, 0.0
        %624 = vadd.xlane.f32.xlu0 %v623
        %v625 = vpop.xlane.xlu0 %624
        %626 = vrot.lane.b32.xlu0 %v332, 48
        %v627 = vpop.permute.xlu0 %626
        %v629 = vsel %vm342, %v621, 0
        %v632 = vsel %vm406, %v627, 0
        %634 = vmatprep.subr.bf16.mxu0 0
        %635 = vmatpush1.bf16.msra.mxu0 0
        %636 = vmatprep.subr.bf16.mxu0 0
        %637 = vmatpush1.bf16.msra.mxu0 0
        %638 = vmatprep.subr.bf16.mxu0 0
        %639 = vmatpush1.bf16.msra.mxu0 0
        %640 = vmatprep.subr.bf16.mxu0 0
        %641 = vmatpush1.bf16.msra.mxu0 0
        %642 = vmatprep.subr.bf16.mxu0 0
        %643 = vmatpush1.bf16.msra.mxu0 0
        %644 = vmatprep.subr.bf16.mxu0 0
        %645 = vmatpush1.bf16.msra.mxu0 0
        %646 = vmatprep.subr.bf16.mxu0 0
        %647 = vmatpush1.bf16.msra.mxu0 0
        %648 = vmatprep.subr.bf16.mxu0 0
        %649 = vmatpush1.bf16.msra.mxu0 %v632
        %650 = vmatprep.subr.bf16.mxu0 0
        %651 = vmatpush2.bf16.msra.mxu0 0
        %652 = vmatprep.subr.bf16.mxu0 0
        %653 = vmatpush2.bf16.msra.mxu0 0
        %654 = vmatprep.subr.bf16.mxu0 0
        %655 = vmatpush2.bf16.msra.mxu0 0
        %656 = vmatprep.subr.bf16.mxu0 0
        %657 = vmatpush2.bf16.msra.mxu0 0
        %658 = vmatprep.subr.bf16.mxu0 0
        %659 = vmatpush2.bf16.msra.mxu0 0
        %660 = vmatprep.subr.bf16.mxu0 0
        %661 = vmatpush2.bf16.msra.mxu0 0
        %662 = vmatprep.subr.bf16.mxu0 0
        %663 = vmatpush2.bf16.msra.mxu0 0
        %664 = vmatprep.subr.bf16.mxu0 0
        %665 = vmatpush2.bf16.msra.mxu0 0
        %666 = vmatprep.mubr.bf16.mxu0 0
        %667 = vmatmul.mubr.bf16.gmra.mxu0 %v629
        %v668 = vpop.f32.mrf.mxu0
        %v669 = vadd.f32 0.0, %v668
        %v670 = vpop.f32.mrf.mxu0
        %v671 = vpop.f32.mrf.mxu0
        %v672 = vpop.f32.mrf.mxu0
        %673 = vdwg.mxu0
        %v674 = vrcp.pop %v625
        %v675 = vmul.f32 %v669, %v674
        %676 = vrot.lane.b32.xlu0 %v332, 104
        %v677 = vpop.permute.xlu0 %676
        %678 = vrot.lane.b32.xlu0 %v332, 72
        %v679 = vpop.permute.xlu0 %678
        %v681 = vsel %vm342, %v677, 0
        %v684 = vsel %vm342, %v679, 0
        %686 = vmatprep.subr.bf16.mxu0 0
        %687 = vmatpush1.bf16.xpose.msra.mxu0 0
        %688 = vmatprep.subr.bf16.mxu0 0
        %689 = vmatpush1.bf16.xpose.msra.mxu0 0
        %690 = vmatprep.subr.bf16.mxu0 0
        %691 = vmatpush1.bf16.xpose.msra.mxu0 0
        %692 = vmatprep.subr.bf16.mxu0 0
        %693 = vmatpush1.bf16.xpose.msra.mxu0 0
        %694 = vmatprep.subr.bf16.mxu0 0
        %695 = vmatpush1.bf16.xpose.msra.mxu0 0
        %696 = vmatprep.subr.bf16.mxu0 0
        %697 = vmatpush1.bf16.xpose.msra.mxu0 0
        %698 = vmatprep.subr.bf16.mxu0 0
        %699 = vmatpush1.bf16.xpose.msra.mxu0 0
        %700 = vmatprep.subr.bf16.mxu0 0
        %701 = vmatpush1.bf16.xpose.msra.mxu0 %v684
        %702 = vmatprep.subr.bf16.mxu0 0
        %703 = vmatpush2.bf16.xpose.msra.mxu0 0
        %704 = vmatprep.subr.bf16.mxu0 0
        %705 = vmatpush2.bf16.xpose.msra.mxu0 0
        %706 = vmatprep.subr.bf16.mxu0 0
        %707 = vmatpush2.bf16.xpose.msra.mxu0 0
        %708 = vmatprep.subr.bf16.mxu0 0
        %709 = vmatpush2.bf16.xpose.msra.mxu0 0
        %710 = vmatprep.subr.bf16.mxu0 0
        %711 = vmatpush2.bf16.xpose.msra.mxu0 0
        %712 = vmatprep.subr.bf16.mxu0 0
        %713 = vmatpush2.bf16.xpose.msra.mxu0 0
        %714 = vmatprep.subr.bf16.mxu0 0
        %715 = vmatpush2.bf16.xpose.msra.mxu0 0
        %716 = vmatprep.subr.bf16.mxu0 0
        %717 = vmatpush2.bf16.xpose.msra.mxu0 0
        %718 = vmatprep.mubr.bf16.mxu0 0
        %719 = vmatmul.mubr.bf16.gmra.mxu0 %v681
        %v720 = vpop.f32.mrf.mxu0
        %v721 = vadd.f32 %v337, %v720
        %v722 = vpop.f32.mrf.mxu0
        %v723 = vpop.f32.mrf.mxu0
        %v724 = vpop.f32.mrf.mxu0
        %725 = vdwg.mxu0
        %v726 = vsel %vm342, %v721, -inf
        %727 = vmax.xlane.f32.xlu0 %v726
        %v728 = vpop.xlane.xlu0 %727
        %v729 = vsub.f32 %v721, %v728
        %v730 = vpack.c.bf16 %v729, %v729
        %v732 = vmul.bf16 %v730, 1069105081
        %v733 = vpow.bf16.pop %v732
        %v734 = vunpack.c.l.bf16 %v733
        %v735 = vsel %vm342, %v734, 0.0
        %736 = vadd.xlane.f32.xlu0 %v735
        %v737 = vpop.xlane.xlu0 %736
        %738 = vrot.lane.b32.xlu0 %v332, 40
        %v739 = vpop.permute.xlu0 %738
        %v741 = vsel %vm342, %v733, 0
        %v744 = vsel %vm406, %v739, 0
        %746 = vmatprep.subr.bf16.mxu0 0
        %747 = vmatpush1.bf16.msra.mxu0 0
        %748 = vmatprep.subr.bf16.mxu0 0
        %749 = vmatpush1.bf16.msra.mxu0 0
        %750 = vmatprep.subr.bf16.mxu0 0
        %751 = vmatpush1.bf16.msra.mxu0 0
        %752 = vmatprep.subr.bf16.mxu0 0
        %753 = vmatpush1.bf16.msra.mxu0 0
        %754 = vmatprep.subr.bf16.mxu0 0
        %755 = vmatpush1.bf16.msra.mxu0 0
        %756 = vmatprep.subr.bf16.mxu0 0
        %757 = vmatpush1.bf16.msra.mxu0 0
        %758 = vmatprep.subr.bf16.mxu0 0
        %759 = vmatpush1.bf16.msra.mxu0 0
        %760 = vmatprep.subr.bf16.mxu0 0
        %761 = vmatpush1.bf16.msra.mxu0 %v744
        %762 = vmatprep.subr.bf16.mxu0 0
        %763 = vmatpush2.bf16.msra.mxu0 0
        %764 = vmatprep.subr.bf16.mxu0 0
        %765 = vmatpush2.bf16.msra.mxu0 0
        %766 = vmatprep.subr.bf16.mxu0 0
        %767 = vmatpush2.bf16.msra.mxu0 0
        %768 = vmatprep.subr.bf16.mxu0 0
        %769 = vmatpush2.bf16.msra.mxu0 0
        %770 = vmatprep.subr.bf16.mxu0 0
        %771 = vmatpush2.bf16.msra.mxu0 0
        %772 = vmatprep.subr.bf16.mxu0 0
        %773 = vmatpush2.bf16.msra.mxu0 0
        %774 = vmatprep.subr.bf16.mxu0 0
        %775 = vmatpush2.bf16.msra.mxu0 0
        %776 = vmatprep.subr.bf16.mxu0 0
        %777 = vmatpush2.bf16.msra.mxu0 0
        %778 = vmatprep.mubr.bf16.mxu0 0
        %779 = vmatmul.mubr.bf16.gmra.mxu0 %v741
        %v780 = vpop.f32.mrf.mxu0
        %v781 = vadd.f32 0.0, %v780
        %v782 = vpop.f32.mrf.mxu0
        %v783 = vpop.f32.mrf.mxu0
        %v784 = vpop.f32.mrf.mxu0
        %785 = vdwg.mxu0
        %v786 = vrcp.pop %v737
        %v787 = vmul.f32 %v781, %v786
        %789 = vrot.lane.b32.xlu0 %v563, 8
        %v790 = vpop.permute.xlu0 %789
        %793 = vrot.lane.b32.xlu0 %v675, 16
        %v794 = vpop.permute.xlu0 %793
        %797 = vrot.lane.b32.xlu0 %v787, 24
        %v798 = vpop.permute.xlu0 %797
        %v800 = vsel %vm342, %v451, %v790
        %vm801 = vcmask 130048
        %v802 = vsel %vm801, %v800, %v794
        %vm803 = vcmask 195584
        %v804 = vsel %vm803, %v802, %v798
        %v805 = vpack.c.bf16 %v804, %v804
        %vm806 = vcmask 257024
        %807 = vst.msk [vmem:[%s260] sm:$0xf] %vm806, %v805
        %s808 = sand.u32 %s126, 1
        %s809 = scalar_lea.sflag [#allocation4], %s808
        %s810 = sand.u32 %s126, 1
        %s811 = smul.addr %s810, 4
        %s812 = scalar_lea.vmem [#allocation8], %s811
        // Predicated region
        $region49: #{tpu_custom_call.1} parent=35 // pred_check
          %p813 = pneg %p136
        $region50: #{tpu_custom_call.1} parent=35 // pred_check_branch
          %815 = sbr.rel (%p813) target = $region52
        $region51: #{tpu_custom_call.1} parent=35 // pred_region
          %s817 = ssub.s32 64, 64
          %818 = vsyncadd %s809, %s817
          %s819 = smul.addr %s24, 64
          %s820 = scalar_lea.hbm %s4, %s819
          %s822 = sshll.u32 %s812, 4
          %s823 = int_to_ptr.vmem [resolvable:$true] %s822
          %825 = dma.vmem_to_hbm [thread:$0]  %s823, 64, %s820, %s809
        $region52: #{tpu_custom_call.1} parent=35 // pred_fallthru
          _
      $region36: #{tpu_custom_call.1} parent=5 // pred_fallthru
        _
      %p826 = scmp.le.s32.totalorder 2, %s19
      // Predicated region
      $region53: #{tpu_custom_call.1} parent=5 // pred_check
        %p827 = pneg %p826
      $region54: #{tpu_custom_call.1} parent=5 // pred_check_branch
        %829 = sbr.rel (%p827) target = $region56
      $region55: #{tpu_custom_call.1} parent=5 // pred_region
        %s830 = ssub.s32 %s19, 2
        // Predicated region
        $region57: #{tpu_custom_call.1} parent=55 // pred_check
          %p831 = pneg %p142
        $region58: #{tpu_custom_call.1} parent=55 // pred_check_branch
          %833 = sbr.rel (%p831) target = $region60
        $region59: #{tpu_custom_call.1} parent=55 // pred_region
          %s834 = sand.u32 %s127, 1
          %s835 = scalar_lea.sflag [#allocation4], %s834
          %s836 = sand.u32 %s127, 1
          %s837 = smul.addr %s836, 4
          %s838 = scalar_lea.vmem [#allocation8], %s837
          %839 = dma.done %s835, 64
        $region60: #{tpu_custom_call.1} parent=55 // pred_fallthru
          _
      $region56: #{tpu_custom_call.1} parent=5 // pred_fallthru
        _
    $region6: #{tpu_custom_call.1} parent=1 // loop_footer
      %s23 = sadd.s32 1, %s19
    $region7: #{tpu_custom_call.1} parent=1 // loop_footer_branch
      %18 = sbr.rel target = $region3
    $region8: #{tpu_custom_call.1} parent=1 // loop_exit
      _
    %840 = vsyncpa [#allocation3], 1
    %s841 = scalar_lea.sflag [#allocation3], 1
    %842 = vsyncpa %s841, 1
    %843 = vsyncpa [#allocation6], 1
    %s844 = scalar_lea.sflag [#allocation6], 1
    %845 = vsyncpa %s844, 1
    %846 = vsyncpa [#allocation4], 1
    %s847 = scalar_lea.sflag [#allocation4], 1
    %848 = vsyncpa %s847, 1

</llo_original>
